<compile_context>
chip_gen: v6e
topology: v6e:2x2x1
jax: 0.10.0
libtpu: 0.0.40
codegen_flags: <defaults>
</compile_context>

<pallas_src>
import functools

import jax
import jax.numpy as jnp
from jax import lax
from jax.experimental import pallas as pl
from jax.experimental.pallas import tpu as pltpu

EPS = 1e-5  # nn.GroupNorm default


def _linear_attention_kernel(x_ref, wqkv_ref, wout_ref, bout_ref, gamma_ref, beta_ref,
                             o_ref, *, num_heads, dim_head):
    # x_ref:     (C_in, HW)        one sample (batch dim squeezed)
    # wqkv_ref:  (3*hidden, C_in)  input_to_qkv 1x1 conv weight (no bias)
    # wout_ref:  (C_in, hidden)    to_output[0] 1x1 conv weight
    # bout_ref:  (C_in, 1)         to_output[0] 1x1 conv bias
    # gamma_ref: (C_in, 1)         GroupNorm(1, C_in) weight
    # beta_ref:  (C_in, 1)         GroupNorm(1, C_in) bias
    hidden = num_heads * dim_head
    scale = 1.0 / (dim_head ** 0.5)

    xv = x_ref[...]                                                        # (C_in, HW) f32

    # input_to_qkv: 1x1 conv (no bias)  ==  (3*hidden, C_in) @ (C_in, HW)
    qkv = jnp.dot(wqkv_ref[...], xv, preferred_element_type=jnp.float32)   # (3*hidden, HW)

    head_outs = []
    for h in range(num_heads):                                  # static unrolled loop
        lo = h * dim_head
        q_h = qkv[lo:lo + dim_head, :]                          # (d, HW)
        k_h = qkv[hidden + lo:hidden + lo + dim_head, :]        # (d, HW)
        v_h = qkv[2 * hidden + lo:2 * hidden + lo + dim_head, :]

        # q: softmax over the head-dim axis (sublane), with 1/sqrt(d) folded in.
        q_m = jnp.max(q_h, axis=0, keepdims=True)
        q_e = jnp.exp(q_h - q_m)
        q_s = q_e * (scale / jnp.sum(q_e, axis=0, keepdims=True))

        # k: softmax over the spatial axis (lane).
        k_m = jnp.max(k_h, axis=1, keepdims=True)
        k_e = jnp.exp(k_h - k_m)
        k_s = k_e / jnp.sum(k_e, axis=1, keepdims=True)

        # context^T[e, d] = sum_n v[e, n] * k[d, n]   (rhs-transposed dot)
        context_t = lax.dot_general(v_h, k_s, (((1,), (1,)), ((), ())),
                                    preferred_element_type=jnp.float32)    # (d, d)
        # out[e, n] = sum_d context^T[e, d] * q[d, n]  (canonical dot)
        out_h = jnp.dot(context_t, q_s, preferred_element_type=jnp.float32)  # (d, HW)
        head_outs.append(out_h)

    attn = jnp.concatenate(head_outs, axis=0)                   # (hidden, HW)

    # to_output[0]: 1x1 conv with bias.
    out = jnp.dot(wout_ref[...], attn, preferred_element_type=jnp.float32) + bout_ref[...]

    # to_output[1]: GroupNorm(1, C_in) — two-pass variance, affine folded into one FMA.
    mu = jnp.mean(out, keepdims=True)                           # (1, 1)
    centered = out - mu
    var = jnp.mean(centered * centered, keepdims=True)          # (1, 1)
    inv = lax.rsqrt(var + EPS)
    y = centered * (gamma_ref[...] * inv) + beta_ref[...]       # (C_in, HW)

    o_ref[...] = y.astype(o_ref.dtype)


def linear_attention(x_nchw, w_qkv, w_out, b_out, gn_gamma, gn_beta,
                     *, num_heads=4, dim_head=32):
    """x_nchw: (N, C, H, W) f32. Returns (N, C, H, W) f32."""
    N, C, H, W = x_nchw.shape
    HW = H * W
    hidden = num_heads * dim_head
    assert HW % 128 == 0, "flattened spatial dim must be a multiple of 128 (lane axis)"
    assert w_qkv.shape[:2] == (3 * hidden, C)
    assert w_out.shape[:2] == (C, hidden)

    x = x_nchw.reshape(N, C, HW).astype(jnp.float32)
    wqkv2 = w_qkv.reshape(3 * hidden, C).astype(jnp.float32)
    wout2 = w_out.reshape(C, hidden).astype(jnp.float32)
    bout2 = b_out.reshape(C, 1).astype(jnp.float32)
    gamma2 = gn_gamma.reshape(C, 1).astype(jnp.float32)
    beta2 = gn_beta.reshape(C, 1).astype(jnp.float32)

    kernel = functools.partial(_linear_attention_kernel,
                               num_heads=num_heads, dim_head=dim_head)

    out = pl.pallas_call(
        kernel,
        out_shape=jax.ShapeDtypeStruct((N, C, HW), jnp.float32),
        grid_spec=pltpu.PrefetchScalarGridSpec(
            num_scalar_prefetch=0,
            grid=(N,),
            in_specs=[
                # batch dim squeezed -> kernel sees plain lane-dense (C, HW)
                pl.BlockSpec((None, C, HW), lambda n: (n, 0, 0)),
                pl.BlockSpec((3 * hidden, C), lambda n: (0, 0)),
                pl.BlockSpec((C, hidden), lambda n: (0, 0)),
                pl.BlockSpec((C, 1), lambda n: (0, 0)),
                pl.BlockSpec((C, 1), lambda n: (0, 0)),
                pl.BlockSpec((C, 1), lambda n: (0, 0)),
            ],
            out_specs=pl.BlockSpec((None, C, HW), lambda n: (n, 0, 0)),
        ),
        compiler_params=pltpu.CompilerParams(dimension_semantics=("parallel",)),
        # TODO(synk): for large C / HW, add an HW-tiling grid axis for the qkv /
        # output-projection stages and a bf16 activation path (stats stay f32).
    )(x, wqkv2, wout2, bout2, gamma2, beta2)

    return out.reshape(N, C, H, W)


def _reference(x, w_qkv, w_out, b_out, gn_gamma, gn_beta, *, num_heads=4, dim_head=32):
    """Pure-JAX reference matching the PyTorch LinearAttention forward."""
    N, C, H, W = x.shape
    HW = H * W
    hidden = num_heads * dim_head
    scale = 1.0 / dim_head ** 0.5
    prec = lax.Precision.HIGHEST

    xf = x.reshape(N, C, HW)
    qkv = jnp.einsum('oc,ncl->nol', w_qkv.reshape(3 * hidden, C), xf, precision=prec)
    q, k, v = jnp.split(qkv, 3, axis=1)
    to_heads = lambda t: t.reshape(N, num_heads, dim_head, HW)
    q, k, v = to_heads(q), to_heads(k), to_heads(v)

    q = jax.nn.softmax(q, axis=-2) * scale
    k = jax.nn.softmax(k, axis=-1)
    context = jnp.einsum('nhdl,nhel->nhde', k, v, precision=prec)
    out = jnp.einsum('nhde,nhdl->nhel', context, q, precision=prec)
    out = out.reshape(N, hidden, HW)

    out = jnp.einsum('oc,ncl->nol', w_out.reshape(C, hidden), out, precision=prec)
    out = out + b_out.reshape(1, C, 1)

    mu = out.mean(axis=(1, 2), keepdims=True)
    var = ((out - mu) ** 2).mean(axis=(1, 2), keepdims=True)
    y = (out - mu) / jnp.sqrt(var + EPS)
    y = y * gn_gamma.reshape(1, C, 1) + gn_beta.reshape(1, C, 1)
    return y.reshape(N, C, H, W)


if __name__ == "__main__":
    key = jax.random.PRNGKey(0)
    k_x, k_qkv, k_w, k_b, k_g, k_be = jax.random.split(key, 6)

    N, C, H, W = 2, 4, 16, 16
    num_heads, dim_head = 4, 32
    hidden = num_heads * dim_head

    x = jax.random.normal(k_x, (N, C, H, W), dtype=jnp.float32)
    w_qkv = jax.random.normal(k_qkv, (3 * hidden, C, 1, 1), dtype=jnp.float32) * 0.2
    w_out = jax.random.normal(k_w, (C, hidden, 1, 1), dtype=jnp.float32) * 0.1
    b_out = jax.random.normal(k_b, (C,), dtype=jnp.float32) * 0.1
    gn_gamma = jax.random.normal(k_g, (C,), dtype=jnp.float32) * 0.1 + 1.0
    gn_beta = jax.random.normal(k_be, (C,), dtype=jnp.float32) * 0.1

    out = linear_attention(x, w_qkv, w_out, b_out, gn_gamma, gn_beta,
                           num_heads=num_heads, dim_head=dim_head)
    out = jax.block_until_ready(out)

    ref = _reference(x, w_qkv, w_out, b_out, gn_gamma, gn_beta,
                     num_heads=num_heads, dim_head=dim_head)
    assert out.shape == (N, C, H, W)
    assert jnp.allclose(out, ref, atol=1e-3, rtol=1e-3), "mismatch vs reference"

    print("KERNEL_OK")
</pallas_src>

<mosaic_0001>
module attributes {stable_mosaic.version = 11 : i64} {
  func.func @_linear_attention_kernel(%arg0: i32, %arg1: memref<1x4x256xf32, #tpu.memory_space<vmem>>, %arg2: memref<384x4xf32, #tpu.memory_space<vmem>>, %arg3: memref<4x128xf32, #tpu.memory_space<vmem>>, %arg4: memref<4x1xf32, #tpu.memory_space<vmem>>, %arg5: memref<4x1xf32, #tpu.memory_space<vmem>>, %arg6: memref<4x1xf32, #tpu.memory_space<vmem>>, %arg7: memref<1x4x256xf32, #tpu.memory_space<vmem>>) attributes {dimension_semantics = [#tpu.dimension_semantics<parallel>], iteration_bounds = array<i64: 2>, scalar_prefetch = 0 : i64, scratch_operands = 0 : i64, tpu.core_type = #tpu.core_type<tc>, window_params = [{transform_indices = @transform_0, window_bounds = array<i64: 1, 4, 256>}, {pipeline_mode = #tpu.pipeline_mode<synchronous>, transform_indices = @transform_1, window_bounds = array<i64: 384, 4>}, {pipeline_mode = #tpu.pipeline_mode<synchronous>, transform_indices = @transform_2, window_bounds = array<i64: 4, 128>}, {pipeline_mode = #tpu.pipeline_mode<synchronous>, transform_indices = @transform_3, window_bounds = array<i64: 4, 1>}, {pipeline_mode = #tpu.pipeline_mode<synchronous>, transform_indices = @transform_4, window_bounds = array<i64: 4, 1>}, {pipeline_mode = #tpu.pipeline_mode<synchronous>, transform_indices = @transform_5, window_bounds = array<i64: 4, 1>}, {transform_indices = @transform_6, window_bounds = array<i64: 1, 4, 256>}]} {
    %c0 = arith.constant 0 : index
    %c0_0 = arith.constant 0 : index
    %c0_1 = arith.constant 0 : index
    %0 = vector.load %arg1[%c0, %c0_0, %c0_1] : memref<1x4x256xf32, #tpu.memory_space<vmem>>, vector<1x4x256xf32>
    %1 = vector.shape_cast %0 : vector<1x4x256xf32> to vector<4x256xf32>
    %c0_2 = arith.constant 0 : index
    %c0_3 = arith.constant 0 : index
    %2 = vector.load %arg2[%c0_2, %c0_3] : memref<384x4xf32, #tpu.memory_space<vmem>>, vector<384x4xf32>
    %cst = arith.constant dense<0.000000e+00> : vector<384x256xf32>
    %3 = tpu.matmul %2, %1, %cst {dimension_numbers = #tpu.dot_dimension_numbers<[1], [0], [0], [1], [0, 0, 1, 1], [], []>} : vector<384x4xf32>, vector<4x256xf32>, vector<384x256xf32> -> vector<384x256xf32>
    %4 = vector.extract_strided_slice %3 {offsets = [0, 0], sizes = [32, 256], strides = [1, 1]} : vector<384x256xf32> to vector<32x256xf32>
    %5 = vector.extract_strided_slice %3 {offsets = [128, 0], sizes = [32, 256], strides = [1, 1]} : vector<384x256xf32> to vector<32x256xf32>
    %6 = vector.extract_strided_slice %3 {offsets = [256, 0], sizes = [32, 256], strides = [1, 1]} : vector<384x256xf32> to vector<32x256xf32>
    %cst_4 = arith.constant dense<0xFF800000> : vector<256xf32>
    %7 = vector.multi_reduction <maximumf>, %4, %cst_4 [0] : vector<32x256xf32> to vector<256xf32>
    %8 = vector.shape_cast %7 : vector<256xf32> to vector<1x256xf32>
    %9 = vector.broadcast %8 : vector<1x256xf32> to vector<32x256xf32>
    %10 = arith.subf %4, %9 : vector<32x256xf32>
    %11 = math.exp %10 : vector<32x256xf32>
    %cst_5 = arith.constant dense<0.000000e+00> : vector<256xf32>
    %12 = vector.multi_reduction <add>, %11, %cst_5 [0] : vector<32x256xf32> to vector<256xf32>
    %13 = vector.shape_cast %12 : vector<256xf32> to vector<1x256xf32>
    %cst_6 = arith.constant 0.176776692 : f32
    %14 = vector.broadcast %cst_6 : f32 to vector<1x256xf32>
    %15 = arith.divf %14, %13 : vector<1x256xf32>
    %16 = vector.broadcast %15 : vector<1x256xf32> to vector<32x256xf32>
    %17 = arith.mulf %11, %16 : vector<32x256xf32>
    %cst_7 = arith.constant dense<0xFF800000> : vector<32xf32>
    %18 = vector.multi_reduction <maximumf>, %5, %cst_7 [1] : vector<32x256xf32> to vector<32xf32>
    %19 = vector.shape_cast %18 : vector<32xf32> to vector<32x1xf32>
    %20 = vector.broadcast %19 : vector<32x1xf32> to vector<32x256xf32>
    %21 = arith.subf %5, %20 : vector<32x256xf32>
    %22 = math.exp %21 : vector<32x256xf32>
    %cst_8 = arith.constant dense<0.000000e+00> : vector<32xf32>
    %23 = vector.multi_reduction <add>, %22, %cst_8 [1] : vector<32x256xf32> to vector<32xf32>
    %24 = vector.shape_cast %23 : vector<32xf32> to vector<32x1xf32>
    %25 = vector.broadcast %24 : vector<32x1xf32> to vector<32x256xf32>
    %26 = arith.divf %22, %25 : vector<32x256xf32>
    %cst_9 = arith.constant dense<0.000000e+00> : vector<32x32xf32>
    %27 = tpu.matmul %6, %26, %cst_9 {dimension_numbers = #tpu.dot_dimension_numbers<[1], [1], [0], [0], [0, 0, 1, 0], [], []>} : vector<32x256xf32>, vector<32x256xf32>, vector<32x32xf32> -> vector<32x32xf32>
    %cst_10 = arith.constant dense<0.000000e+00> : vector<32x256xf32>
    %28 = tpu.matmul %27, %17, %cst_10 {dimension_numbers = #tpu.dot_dimension_numbers<[1], [0], [0], [1], [0, 0, 1, 1], [], []>} : vector<32x32xf32>, vector<32x256xf32>, vector<32x256xf32> -> vector<32x256xf32>
    %29 = vector.extract_strided_slice %3 {offsets = [32, 0], sizes = [32, 256], strides = [1, 1]} : vector<384x256xf32> to vector<32x256xf32>
    %30 = vector.extract_strided_slice %3 {offsets = [160, 0], sizes = [32, 256], strides = [1, 1]} : vector<384x256xf32> to vector<32x256xf32>
    %31 = vector.extract_strided_slice %3 {offsets = [288, 0], sizes = [32, 256], strides = [1, 1]} : vector<384x256xf32> to vector<32x256xf32>
    %cst_11 = arith.constant dense<0xFF800000> : vector<256xf32>
    %32 = vector.multi_reduction <maximumf>, %29, %cst_11 [0] : vector<32x256xf32> to vector<256xf32>
    %33 = vector.shape_cast %32 : vector<256xf32> to vector<1x256xf32>
    %34 = vector.broadcast %33 : vector<1x256xf32> to vector<32x256xf32>
    %35 = arith.subf %29, %34 : vector<32x256xf32>
    %36 = math.exp %35 : vector<32x256xf32>
    %cst_12 = arith.constant dense<0.000000e+00> : vector<256xf32>
    %37 = vector.multi_reduction <add>, %36, %cst_12 [0] : vector<32x256xf32> to vector<256xf32>
    %38 = vector.shape_cast %37 : vector<256xf32> to vector<1x256xf32>
    %cst_13 = arith.constant 0.176776692 : f32
    %39 = vector.broadcast %cst_13 : f32 to vector<1x256xf32>
    %40 = arith.divf %39, %38 : vector<1x256xf32>
    %41 = vector.broadcast %40 : vector<1x256xf32> to vector<32x256xf32>
    %42 = arith.mulf %36, %41 : vector<32x256xf32>
    %cst_14 = arith.constant dense<0xFF800000> : vector<32xf32>
    %43 = vector.multi_reduction <maximumf>, %30, %cst_14 [1] : vector<32x256xf32> to vector<32xf32>
    %44 = vector.shape_cast %43 : vector<32xf32> to vector<32x1xf32>
    %45 = vector.broadcast %44 : vector<32x1xf32> to vector<32x256xf32>
    %46 = arith.subf %30, %45 : vector<32x256xf32>
    %47 = math.exp %46 : vector<32x256xf32>
    %cst_15 = arith.constant dense<0.000000e+00> : vector<32xf32>
    %48 = vector.multi_reduction <add>, %47, %cst_15 [1] : vector<32x256xf32> to vector<32xf32>
    %49 = vector.shape_cast %48 : vector<32xf32> to vector<32x1xf32>
    %50 = vector.broadcast %49 : vector<32x1xf32> to vector<32x256xf32>
    %51 = arith.divf %47, %50 : vector<32x256xf32>
    %cst_16 = arith.constant dense<0.000000e+00> : vector<32x32xf32>
    %52 = tpu.matmul %31, %51, %cst_16 {dimension_numbers = #tpu.dot_dimension_numbers<[1], [1], [0], [0], [0, 0, 1, 0], [], []>} : vector<32x256xf32>, vector<32x256xf32>, vector<32x32xf32> -> vector<32x32xf32>
    %cst_17 = arith.constant dense<0.000000e+00> : vector<32x256xf32>
    %53 = tpu.matmul %52, %42, %cst_17 {dimension_numbers = #tpu.dot_dimension_numbers<[1], [0], [0], [1], [0, 0, 1, 1], [], []>} : vector<32x32xf32>, vector<32x256xf32>, vector<32x256xf32> -> vector<32x256xf32>
    %54 = vector.extract_strided_slice %3 {offsets = [64, 0], sizes = [32, 256], strides = [1, 1]} : vector<384x256xf32> to vector<32x256xf32>
    %55 = vector.extract_strided_slice %3 {offsets = [192, 0], sizes = [32, 256], strides = [1, 1]} : vector<384x256xf32> to vector<32x256xf32>
    %56 = vector.extract_strided_slice %3 {offsets = [320, 0], sizes = [32, 256], strides = [1, 1]} : vector<384x256xf32> to vector<32x256xf32>
    %cst_18 = arith.constant dense<0xFF800000> : vector<256xf32>
    %57 = vector.multi_reduction <maximumf>, %54, %cst_18 [0] : vector<32x256xf32> to vector<256xf32>
    %58 = vector.shape_cast %57 : vector<256xf32> to vector<1x256xf32>
    %59 = vector.broadcast %58 : vector<1x256xf32> to vector<32x256xf32>
    %60 = arith.subf %54, %59 : vector<32x256xf32>
    %61 = math.exp %60 : vector<32x256xf32>
    %cst_19 = arith.constant dense<0.000000e+00> : vector<256xf32>
    %62 = vector.multi_reduction <add>, %61, %cst_19 [0] : vector<32x256xf32> to vector<256xf32>
    %63 = vector.shape_cast %62 : vector<256xf32> to vector<1x256xf32>
    %cst_20 = arith.constant 0.176776692 : f32
    %64 = vector.broadcast %cst_20 : f32 to vector<1x256xf32>
    %65 = arith.divf %64, %63 : vector<1x256xf32>
    %66 = vector.broadcast %65 : vector<1x256xf32> to vector<32x256xf32>
    %67 = arith.mulf %61, %66 : vector<32x256xf32>
    %cst_21 = arith.constant dense<0xFF800000> : vector<32xf32>
    %68 = vector.multi_reduction <maximumf>, %55, %cst_21 [1] : vector<32x256xf32> to vector<32xf32>
    %69 = vector.shape_cast %68 : vector<32xf32> to vector<32x1xf32>
    %70 = vector.broadcast %69 : vector<32x1xf32> to vector<32x256xf32>
    %71 = arith.subf %55, %70 : vector<32x256xf32>
    %72 = math.exp %71 : vector<32x256xf32>
    %cst_22 = arith.constant dense<0.000000e+00> : vector<32xf32>
    %73 = vector.multi_reduction <add>, %72, %cst_22 [1] : vector<32x256xf32> to vector<32xf32>
    %74 = vector.shape_cast %73 : vector<32xf32> to vector<32x1xf32>
    %75 = vector.broadcast %74 : vector<32x1xf32> to vector<32x256xf32>
    %76 = arith.divf %72, %75 : vector<32x256xf32>
    %cst_23 = arith.constant dense<0.000000e+00> : vector<32x32xf32>
    %77 = tpu.matmul %56, %76, %cst_23 {dimension_numbers = #tpu.dot_dimension_numbers<[1], [1], [0], [0], [0, 0, 1, 0], [], []>} : vector<32x256xf32>, vector<32x256xf32>, vector<32x32xf32> -> vector<32x32xf32>
    %cst_24 = arith.constant dense<0.000000e+00> : vector<32x256xf32>
    %78 = tpu.matmul %77, %67, %cst_24 {dimension_numbers = #tpu.dot_dimension_numbers<[1], [0], [0], [1], [0, 0, 1, 1], [], []>} : vector<32x32xf32>, vector<32x256xf32>, vector<32x256xf32> -> vector<32x256xf32>
    %79 = vector.extract_strided_slice %3 {offsets = [96, 0], sizes = [32, 256], strides = [1, 1]} : vector<384x256xf32> to vector<32x256xf32>
    %80 = vector.extract_strided_slice %3 {offsets = [224, 0], sizes = [32, 256], strides = [1, 1]} : vector<384x256xf32> to vector<32x256xf32>
    %81 = vector.extract_strided_slice %3 {offsets = [352, 0], sizes = [32, 256], strides = [1, 1]} : vector<384x256xf32> to vector<32x256xf32>
    %cst_25 = arith.constant dense<0xFF800000> : vector<256xf32>
    %82 = vector.multi_reduction <maximumf>, %79, %cst_25 [0] : vector<32x256xf32> to vector<256xf32>
    %83 = vector.shape_cast %82 : vector<256xf32> to vector<1x256xf32>
    %84 = vector.broadcast %83 : vector<1x256xf32> to vector<32x256xf32>
    %85 = arith.subf %79, %84 : vector<32x256xf32>
    %86 = math.exp %85 : vector<32x256xf32>
    %cst_26 = arith.constant dense<0.000000e+00> : vector<256xf32>
    %87 = vector.multi_reduction <add>, %86, %cst_26 [0] : vector<32x256xf32> to vector<256xf32>
    %88 = vector.shape_cast %87 : vector<256xf32> to vector<1x256xf32>
    %cst_27 = arith.constant 0.176776692 : f32
    %89 = vector.broadcast %cst_27 : f32 to vector<1x256xf32>
    %90 = arith.divf %89, %88 : vector<1x256xf32>
    %91 = vector.broadcast %90 : vector<1x256xf32> to vector<32x256xf32>
    %92 = arith.mulf %86, %91 : vector<32x256xf32>
    %cst_28 = arith.constant dense<0xFF800000> : vector<32xf32>
    %93 = vector.multi_reduction <maximumf>, %80, %cst_28 [1] : vector<32x256xf32> to vector<32xf32>
    %94 = vector.shape_cast %93 : vector<32xf32> to vector<32x1xf32>
    %95 = vector.broadcast %94 : vector<32x1xf32> to vector<32x256xf32>
    %96 = arith.subf %80, %95 : vector<32x256xf32>
    %97 = math.exp %96 : vector<32x256xf32>
    %cst_29 = arith.constant dense<0.000000e+00> : vector<32xf32>
    %98 = vector.multi_reduction <add>, %97, %cst_29 [1] : vector<32x256xf32> to vector<32xf32>
    %99 = vector.shape_cast %98 : vector<32xf32> to vector<32x1xf32>
    %100 = vector.broadcast %99 : vector<32x1xf32> to vector<32x256xf32>
    %101 = arith.divf %97, %100 : vector<32x256xf32>
    %cst_30 = arith.constant dense<0.000000e+00> : vector<32x32xf32>
    %102 = tpu.matmul %81, %101, %cst_30 {dimension_numbers = #tpu.dot_dimension_numbers<[1], [1], [0], [0], [0, 0, 1, 0], [], []>} : vector<32x256xf32>, vector<32x256xf32>, vector<32x32xf32> -> vector<32x32xf32>
    %cst_31 = arith.constant dense<0.000000e+00> : vector<32x256xf32>
    %103 = tpu.matmul %102, %92, %cst_31 {dimension_numbers = #tpu.dot_dimension_numbers<[1], [0], [0], [1], [0, 0, 1, 1], [], []>} : vector<32x32xf32>, vector<32x256xf32>, vector<32x256xf32> -> vector<32x256xf32>
    %104 = tpu.concatenate %28, %53, %78, %103 in 0 : vector<32x256xf32>, vector<32x256xf32>, vector<32x256xf32>, vector<32x256xf32> -> vector<128x256xf32>
    %c0_32 = arith.constant 0 : index
    %c0_33 = arith.constant 0 : index
    %105 = vector.load %arg3[%c0_32, %c0_33] : memref<4x128xf32, #tpu.memory_space<vmem>>, vector<4x128xf32>
    %cst_34 = arith.constant dense<0.000000e+00> : vector<4x256xf32>
    %106 = tpu.matmul %105, %104, %cst_34 {dimension_numbers = #tpu.dot_dimension_numbers<[1], [0], [0], [1], [0, 0, 1, 1], [], []>} : vector<4x128xf32>, vector<128x256xf32>, vector<4x256xf32> -> vector<4x256xf32>
    %c0_35 = arith.constant 0 : index
    %c0_36 = arith.constant 0 : index
    %107 = vector.load %arg4[%c0_35, %c0_36] : memref<4x1xf32, #tpu.memory_space<vmem>>, vector<4x1xf32>
    %108 = vector.broadcast %107 : vector<4x1xf32> to vector<4x256xf32>
    %109 = arith.addf %106, %108 : vector<4x256xf32>
    %110 = vector.shape_cast %109 : vector<4x256xf32> to vector<1x4x256xf32>
    %cst_37 = arith.constant dense<0.000000e+00> : vector<1xf32>
    %111 = vector.multi_reduction <add>, %110, %cst_37 [1, 2] : vector<1x4x256xf32> to vector<1xf32>
    %112 = vector.shape_cast %111 : vector<1xf32> to vector<1x1x1xf32>
    %113 = vector.extract %112[0, 0, 0] : f32 from vector<1x1x1xf32>
    %114 = vector.broadcast %113 : f32 to vector<1x1xf32>
    %cst_38 = arith.constant 1.024000e+03 : f32
    %115 = vector.broadcast %cst_38 : f32 to vector<1x1xf32>
    %116 = arith.divf %114, %115 : vector<1x1xf32>
    %117 = vector.broadcast %116 : vector<1x1xf32> to vector<4x256xf32>
    %118 = arith.subf %109, %117 : vector<4x256xf32>
    %119 = arith.mulf %118, %118 : vector<4x256xf32>
    %120 = vector.shape_cast %119 : vector<4x256xf32> to vector<1x4x256xf32>
    %cst_39 = arith.constant dense<0.000000e+00> : vector<1xf32>
    %121 = vector.multi_reduction <add>, %120, %cst_39 [1, 2] : vector<1x4x256xf32> to vector<1xf32>
    %122 = vector.shape_cast %121 : vector<1xf32> to vector<1x1x1xf32>
    %123 = vector.extract %122[0, 0, 0] : f32 from vector<1x1x1xf32>
    %124 = vector.broadcast %123 : f32 to vector<1x1xf32>
    %cst_40 = arith.constant 1.024000e+03 : f32
    %125 = vector.broadcast %cst_40 : f32 to vector<1x1xf32>
    %126 = arith.divf %124, %125 : vector<1x1xf32>
    %cst_41 = arith.constant 9.99999974E-6 : f32
    %127 = vector.broadcast %cst_41 : f32 to vector<1x1xf32>
    %128 = arith.addf %126, %127 : vector<1x1xf32>
    %129 = math.rsqrt %128 : vector<1x1xf32>
    %c0_42 = arith.constant 0 : index
    %c0_43 = arith.constant 0 : index
    %130 = vector.load %arg5[%c0_42, %c0_43] : memref<4x1xf32, #tpu.memory_space<vmem>>, vector<4x1xf32>
    %131 = vector.broadcast %129 : vector<1x1xf32> to vector<4x1xf32>
    %132 = arith.mulf %130, %131 : vector<4x1xf32>
    %133 = vector.broadcast %132 : vector<4x1xf32> to vector<4x256xf32>
    %134 = arith.mulf %118, %133 : vector<4x256xf32>
    %c0_44 = arith.constant 0 : index
    %c0_45 = arith.constant 0 : index
    %135 = vector.load %arg6[%c0_44, %c0_45] : memref<4x1xf32, #tpu.memory_space<vmem>>, vector<4x1xf32>
    %136 = vector.broadcast %135 : vector<4x1xf32> to vector<4x256xf32>
    %137 = arith.addf %134, %136 : vector<4x256xf32>
    %c0_46 = arith.constant 0 : index
    %c0_47 = arith.constant 0 : index
    %c0_48 = arith.constant 0 : index
    %138 = vector.load %arg7[%c0_46, %c0_47, %c0_48] : memref<1x4x256xf32, #tpu.memory_space<vmem>>, vector<1x4x256xf32>
    %139 = vector.shape_cast %138 : vector<1x4x256xf32> to vector<4x256xf32>
    %140 = vector.shape_cast %137 : vector<4x256xf32> to vector<1x4x256xf32>
    tpu.vector_store %arg7[%c0_46, %c0_47, %c0_48], %140 {strides = array<i32>} : memref<1x4x256xf32, #tpu.memory_space<vmem>>, vector<1x4x256xf32>,
    return
  }
  func.func @transform_0(%arg0: i32) -> (i32, i32, i32) {
    %c0_i32 = arith.constant 0 : i32
    %c0_i32_0 = arith.constant 0 : i32
    %c0_i32_1 = arith.constant 0 : i32
    return %arg0, %c0_i32, %c0_i32_0 : i32, i32, i32
  }
  func.func @transform_1(%arg0: i32) -> (i32, i32) {
    %c0_i32 = arith.constant 0 : i32
    %c0_i32_0 = arith.constant 0 : i32
    %c0_i32_1 = arith.constant 0 : i32
    return %c0_i32, %c0_i32_0 : i32, i32
  }
  func.func @transform_2(%arg0: i32) -> (i32, i32) {
    %c0_i32 = arith.constant 0 : i32
    %c0_i32_0 = arith.constant 0 : i32
    %c0_i32_1 = arith.constant 0 : i32
    return %c0_i32, %c0_i32_0 : i32, i32
  }
  func.func @transform_3(%arg0: i32) -> (i32, i32) {
    %c0_i32 = arith.constant 0 : i32
    %c0_i32_0 = arith.constant 0 : i32
    %c0_i32_1 = arith.constant 0 : i32
    return %c0_i32, %c0_i32_0 : i32, i32
  }
  func.func @transform_4(%arg0: i32) -> (i32, i32) {
    %c0_i32 = arith.constant 0 : i32
    %c0_i32_0 = arith.constant 0 : i32
    %c0_i32_1 = arith.constant 0 : i32
    return %c0_i32, %c0_i32_0 : i32, i32
  }
  func.func @transform_5(%arg0: i32) -> (i32, i32) {
    %c0_i32 = arith.constant 0 : i32
    %c0_i32_0 = arith.constant 0 : i32
    %c0_i32_1 = arith.constant 0 : i32
    return %c0_i32, %c0_i32_0 : i32, i32
  }
  func.func @transform_6(%arg0: i32) -> (i32, i32, i32) {
    %c0_i32 = arith.constant 0 : i32
    %c0_i32_0 = arith.constant 0 : i32
    %c0_i32_1 = arith.constant 0 : i32
    return %arg0, %c0_i32, %c0_i32_0 : i32, i32, i32
  }
}

</mosaic_0001>

<llo_original>
// kernel: tpu_custom_call.1
$region0: #{tpu_custom_call.1}
  #allocation0 [shape = 'u32[]', space=smem, size = 0x4, offset = 0x4, fixed_abs, tag = 'smem constant byte address 0x4 - core index']
  #allocation1 [shape = 'u32[144,128]{1,0:T(1,128)}', space=vmem, size = 0x12000, scoped, tag = 'internal scratch']
  %s0 = inlined_call_operand.vmem [shape: f32[2,4,256], index: 0, kind: input, shape index: {}]
  %s1 = inlined_call_operand.vmem [shape: f32[384,4], index: 1, kind: input, shape index: {}]
  %s2 = inlined_call_operand.vmem [shape: f32[4,128], index: 2, kind: input, shape index: {}]
  %s3 = inlined_call_operand.vmem [shape: f32[4,1], index: 3, kind: input, shape index: {}]
  %s4 = inlined_call_operand.vmem [shape: f32[4,1], index: 4, kind: input, shape index: {}]
  %s5 = inlined_call_operand.vmem [shape: f32[4,1], index: 5, kind: input, shape index: {}]
  %s6 = inlined_call_operand.hbm [shape: f32[2,4,256], index: 6, kind: output, shape index: {}]
  %s7 = sld [smem:[#allocation0]]
  $region57: #{tpu_custom_call.1} parent=0
    _
  %s9 = ssub.s32 1, %s7
  %s10 = scalar_select 0, %s9, %s7
  $region1: #{tpu_custom_call.1} parent=0
    #allocation2 [shape = 'u8[8192]{0}', space=vmem, size = 0x2000, scoped, tag = 'output window, operand 0']
    #allocation3 [shape = 's32[2]{0}', space=sflag, size = 0x8, scoped, tag = 'scoped memory for tpu_custom_call.1']
    %11 = vsyncpa [#allocation3], 0
    %s12 = scalar_lea.sflag [#allocation3], 1
    %13 = vsyncpa %s12, 0
    loop: start=0, step=1, limit=4
    $region2: #{tpu_custom_call.1} parent=1 // loop_pre_header
      _
    $region3: #{tpu_custom_call.1} parent=1 // loop_header
      %s15 = sphi 0, %s19
      %p16 = scmp.ge.s32.totalorder %s15, 4
      %s25 = sphi 0, %s27
      %s28 = sphi 0, %s25
      %s29 = sphi 0, %s28
      %s45 = sphi 0, %s29
      %s49 = sphi 0, %s49
      %s51 = sphi 0, %s49
      %s52 = sphi 0, %s51
      %s66 = sphi 0, %s52
      %s70 = sphi 0, %s70
      %s72 = sphi 0, %s70
      %s73 = sphi 0, %s72
      %s87 = sphi 0, %s73
      %s91 = sphi 0, %s91
      %s93 = sphi 0, %s91
      %s94 = sphi 0, %s93
      %s108 = sphi 0, %s94
      %s112 = sphi 0, %s112
      %s114 = sphi 0, %s112
      %s115 = sphi 0, %s114
      %s129 = sphi 0, %s115
      %s133 = sphi 0, %s133
      %s135 = sphi 0, %s133
      %s136 = sphi 0, %s135
      %s150 = sphi 0, %s136
      %s156 = sphi 0, %s158
      %s159 = sphi 0, %s156
      %s160 = sphi 0, %s159
      %s176 = sphi 0, %s160
    $region4: #{tpu_custom_call.1} parent=1 // loop_header_branch
      %18 = sbr.rel (%p16) target = $region8
    $region5: #{tpu_custom_call.1} parent=1 // loop_body
      %s20 = ssub.s32 %s15, 1
      %s21 = ssub.s32 %s15, 2
      %s22 = sadd.s32 %s15, 1
      %s23 = ssub.s32 %s15, %s22
      %p24 = scmp.eq.s32.totalorder %s23, 0
      %s26 = sadd.s32 %s25, 1
      %s27 = scalar_select %p24, %s25, %s26
      %p30 = pneg %p24
      %p31 = scmp.eq.s32.totalorder %s15, 1
      %p32 = por %p30, %p31
      %p33 = scmp.ne.s32.totalorder %s25, %s28
      %p34 = scmp.eq.s32.totalorder %s15, 0
      %p35 = por %p33, %p34
      %p36 = scmp.ne.s32.totalorder %s25, %s28
      %p37 = scmp.eq.s32.totalorder %s20, 1
      %p38 = por %p36, %p37
      %p39 = scmp.ne.s32.totalorder %s28, %s29
      %p40 = scmp.eq.s32.totalorder %s20, 0
      %p41 = por %p39, %p40
      %p42 = scmp.ne.s32.totalorder %s28, %s29
      %p43 = scmp.eq.s32.totalorder %s21, 1
      %p44 = por %p42, %p43
      %p46 = scmp.ne.s32.totalorder %s29, %s45
      %p47 = scmp.eq.s32.totalorder %s21, 0
      %p48 = por %p46, %p47
      %s50 = sadd.s32 %s49, 1
      %p53 = scmp.eq.s32.totalorder %s15, 1
      %p54 = scmp.ne.s32.totalorder %s49, %s51
      %p55 = scmp.eq.s32.totalorder %s15, 0
      %p56 = por %p54, %p55
      %p57 = scmp.ne.s32.totalorder %s49, %s51
      %p58 = scmp.eq.s32.totalorder %s20, 1
      %p59 = por %p57, %p58
      %p60 = scmp.ne.s32.totalorder %s51, %s52
      %p61 = scmp.eq.s32.totalorder %s20, 0
      %p62 = por %p60, %p61
      %p63 = scmp.ne.s32.totalorder %s51, %s52
      %p64 = scmp.eq.s32.totalorder %s21, 1
      %p65 = por %p63, %p64
      %p67 = scmp.ne.s32.totalorder %s52, %s66
      %p68 = scmp.eq.s32.totalorder %s21, 0
      %p69 = por %p67, %p68
      %s71 = sadd.s32 %s70, 1
      %p74 = scmp.eq.s32.totalorder %s15, 1
      %p75 = scmp.ne.s32.totalorder %s70, %s72
      %p76 = scmp.eq.s32.totalorder %s15, 0
      %p77 = por %p75, %p76
      %p78 = scmp.ne.s32.totalorder %s70, %s72
      %p79 = scmp.eq.s32.totalorder %s20, 1
      %p80 = por %p78, %p79
      %p81 = scmp.ne.s32.totalorder %s72, %s73
      %p82 = scmp.eq.s32.totalorder %s20, 0
      %p83 = por %p81, %p82
      %p84 = scmp.ne.s32.totalorder %s72, %s73
      %p85 = scmp.eq.s32.totalorder %s21, 1
      %p86 = por %p84, %p85
      %p88 = scmp.ne.s32.totalorder %s73, %s87
      %p89 = scmp.eq.s32.totalorder %s21, 0
      %p90 = por %p88, %p89
      %s92 = sadd.s32 %s91, 1
      %p95 = scmp.eq.s32.totalorder %s15, 1
      %p96 = scmp.ne.s32.totalorder %s91, %s93
      %p97 = scmp.eq.s32.totalorder %s15, 0
      %p98 = por %p96, %p97
      %p99 = scmp.ne.s32.totalorder %s91, %s93
      %p100 = scmp.eq.s32.totalorder %s20, 1
      %p101 = por %p99, %p100
      %p102 = scmp.ne.s32.totalorder %s93, %s94
      %p103 = scmp.eq.s32.totalorder %s20, 0
      %p104 = por %p102, %p103
      %p105 = scmp.ne.s32.totalorder %s93, %s94
      %p106 = scmp.eq.s32.totalorder %s21, 1
      %p107 = por %p105, %p106
      %p109 = scmp.ne.s32.totalorder %s94, %s108
      %p110 = scmp.eq.s32.totalorder %s21, 0
      %p111 = por %p109, %p110
      %s113 = sadd.s32 %s112, 1
      %p116 = scmp.eq.s32.totalorder %s15, 1
      %p117 = scmp.ne.s32.totalorder %s112, %s114
      %p118 = scmp.eq.s32.totalorder %s15, 0
      %p119 = por %p117, %p118
      %p120 = scmp.ne.s32.totalorder %s112, %s114
      %p121 = scmp.eq.s32.totalorder %s20, 1
      %p122 = por %p120, %p121
      %p123 = scmp.ne.s32.totalorder %s114, %s115
      %p124 = scmp.eq.s32.totalorder %s20, 0
      %p125 = por %p123, %p124
      %p126 = scmp.ne.s32.totalorder %s114, %s115
      %p127 = scmp.eq.s32.totalorder %s21, 1
      %p128 = por %p126, %p127
      %p130 = scmp.ne.s32.totalorder %s115, %s129
      %p131 = scmp.eq.s32.totalorder %s21, 0
      %p132 = por %p130, %p131
      %s134 = sadd.s32 %s133, 1
      %p137 = scmp.eq.s32.totalorder %s15, 1
      %p138 = scmp.ne.s32.totalorder %s133, %s135
      %p139 = scmp.eq.s32.totalorder %s15, 0
      %p140 = por %p138, %p139
      %p141 = scmp.ne.s32.totalorder %s133, %s135
      %p142 = scmp.eq.s32.totalorder %s20, 1
      %p143 = por %p141, %p142
      %p144 = scmp.ne.s32.totalorder %s135, %s136
      %p145 = scmp.eq.s32.totalorder %s20, 0
      %p146 = por %p144, %p145
      %p147 = scmp.ne.s32.totalorder %s135, %s136
      %p148 = scmp.eq.s32.totalorder %s21, 1
      %p149 = por %p147, %p148
      %p151 = scmp.ne.s32.totalorder %s136, %s150
      %p152 = scmp.eq.s32.totalorder %s21, 0
      %p153 = por %p151, %p152
      %s154 = ssub.s32 %s15, %s22
      %p155 = scmp.eq.s32.totalorder %s154, 0
      %s157 = sadd.s32 %s156, 1
      %s158 = scalar_select %p155, %s156, %s157
      %p161 = pneg %p155
      %p162 = scmp.eq.s32.totalorder %s15, 1
      %p163 = por %p161, %p162
      %p164 = scmp.ne.s32.totalorder %s156, %s159
      %p165 = scmp.eq.s32.totalorder %s15, 0
      %p166 = por %p164, %p165
      %p167 = scmp.ne.s32.totalorder %s156, %s159
      %p168 = scmp.eq.s32.totalorder %s20, 1
      %p169 = por %p167, %p168
      %p170 = scmp.ne.s32.totalorder %s159, %s160
      %p171 = scmp.eq.s32.totalorder %s20, 0
      %p172 = por %p170, %p171
      %p173 = scmp.ne.s32.totalorder %s159, %s160
      %p174 = scmp.eq.s32.totalorder %s21, 1
      %p175 = por %p173, %p174
      %p177 = scmp.ne.s32.totalorder %s160, %s176
      %p178 = scmp.eq.s32.totalorder %s21, 0
      %p179 = por %p177, %p178
      %p180 = scmp.le.s32.totalorder 1, %s15
      %p181 = scmp.lt.s32.totalorder %s15, 3
      %p182 = pnand %p180, %p181
      %p183 = pneg %p182
      // Predicated region
      $region9: #{tpu_custom_call.1} parent=5 // pred_check
        _
      $region10: #{tpu_custom_call.1} parent=5 // pred_check_branch
        %185 = sbr.rel (%p182) target = $region12
      $region11: #{tpu_custom_call.1} parent=5 // pred_region
        %s186 = ssub.s32 %s15, 1
        // Predicated region
        $region13: #{tpu_custom_call.1} parent=11 // pred_check
          %p187 = pneg %p62
        $region14: #{tpu_custom_call.1} parent=11 // pred_check_branch
          %189 = sbr.rel (%p187) target = $region16
        $region15: #{tpu_custom_call.1} parent=11 // pred_region
          _
        $region16: #{tpu_custom_call.1} parent=11 // pred_fallthru
          _
        // Predicated region
        $region17: #{tpu_custom_call.1} parent=11 // pred_check
          %p190 = pneg %p83
        $region18: #{tpu_custom_call.1} parent=11 // pred_check_branch
          %192 = sbr.rel (%p190) target = $region20
        $region19: #{tpu_custom_call.1} parent=11 // pred_region
          _
        $region20: #{tpu_custom_call.1} parent=11 // pred_fallthru
          _
        // Predicated region
        $region21: #{tpu_custom_call.1} parent=11 // pred_check
          %p193 = pneg %p104
        $region22: #{tpu_custom_call.1} parent=11 // pred_check_branch
          %195 = sbr.rel (%p193) target = $region24
        $region23: #{tpu_custom_call.1} parent=11 // pred_region
          _
        $region24: #{tpu_custom_call.1} parent=11 // pred_fallthru
          _
        // Predicated region
        $region25: #{tpu_custom_call.1} parent=11 // pred_check
          %p196 = pneg %p125
        $region26: #{tpu_custom_call.1} parent=11 // pred_check_branch
          %198 = sbr.rel (%p196) target = $region28
        $region27: #{tpu_custom_call.1} parent=11 // pred_region
          _
        $region28: #{tpu_custom_call.1} parent=11 // pred_fallthru
          _
        // Predicated region
        $region29: #{tpu_custom_call.1} parent=11 // pred_check
          %p199 = pneg %p146
        $region30: #{tpu_custom_call.1} parent=11 // pred_check_branch
          %201 = sbr.rel (%p199) target = $region32
        $region31: #{tpu_custom_call.1} parent=11 // pred_region
          _
        $region32: #{tpu_custom_call.1} parent=11 // pred_fallthru
          _
      $region12: #{tpu_custom_call.1} parent=5 // pred_fallthru
        _
      %p202 = scmp.lt.s32.totalorder %s15, 2
      // Predicated region
      $region33: #{tpu_custom_call.1} parent=5 // pred_check
        %p203 = pneg %p202
      $region34: #{tpu_custom_call.1} parent=5 // pred_check_branch
        %205 = sbr.rel (%p203) target = $region36
      $region35: #{tpu_custom_call.1} parent=5 // pred_region
        // Predicated region
        $region37: #{tpu_custom_call.1} parent=35 // pred_check
          %p206 = pneg %p35
        $region38: #{tpu_custom_call.1} parent=35 // pred_check_branch
          %208 = sbr.rel (%p206) target = $region40
        $region39: #{tpu_custom_call.1} parent=35 // pred_region
          %p209 = scmp.lt.s32.totalorder %s15, 1
          %s210 = scalar_select %p209, %s15, 1
          %s211 = smul.addr %s210, 2
          %s212 = smul.addr %s211, 4
          %s213 = scalar_lea.vmem %s0, %s212
        $region40: #{tpu_custom_call.1} parent=35 // pred_fallthru
          _
      $region36: #{tpu_custom_call.1} parent=5 // pred_fallthru
        _
      %p214 = scmp.le.s32.totalorder 1, %s15
      %p215 = scmp.lt.s32.totalorder %s15, 3
      %p216 = pnand %p214, %p215
      %p217 = pneg %p216
      // Predicated region
      $region41: #{tpu_custom_call.1} parent=5 // pred_check
        _
      $region42: #{tpu_custom_call.1} parent=5 // pred_check_branch
        %219 = sbr.rel (%p216) target = $region44
      $region43: #{tpu_custom_call.1} parent=5 // pred_region
        %s220 = ssub.s32 %s15, 1
        %p221 = scmp.lt.s32.totalorder %s20, 1
        %s222 = scalar_select %p221, %s20, 1
        %s223 = smul.addr %s222, 2
        %s224 = smul.addr %s223, 4
        %s225 = scalar_lea.vmem %s0, %s224
        %p226 = pneg %p41
        %p227 = pneg %p38
        %p228 = pneg %p62
        %p229 = pneg %p59
        %p230 = pneg %p83
        %p231 = pneg %p80
        %p232 = pneg %p104
        %p233 = pneg %p101
        %p234 = pneg %p125
        %p235 = pneg %p122
        %p236 = pneg %p146
        %p237 = pneg %p143
        %p238 = pneg %p172
        %p239 = pneg %p169
        %s240 = sand.u32 %s159, 1
        %s241 = scalar_lea.sflag [#allocation3], %s240
        %s242 = sand.u32 %s159, 1
        %s243 = smul.addr %s242, 8
        %s244 = scalar_lea.vmem [#allocation2], %s243
        %p245 = scmp.lt.s32.totalorder %s20, 1
        %s246 = scalar_select %p245, %s20, 1
        %s247 = smul.addr %s246, 2
        %s248 = smul.addr %s247, 4
        %s249 = scalar_lea.vmem %s0, %s248
        %v250 = vld [vmem:[%s249] sm:$0xff]
        %v251 = vld [vmem:[%s1] sm:$0xff]
        %v252 = vld [vmem:[%s1 + $0x8] sm:$0xff]
        %v253 = vld [vmem:[%s1 + $0x10] sm:$0xff]
        %v254 = vld [vmem:[%s1 + $0x18] sm:$0xff]
        %v255 = vld [vmem:[%s1 + $0x20] sm:$0xff]
        %v256 = vld [vmem:[%s1 + $0x28] sm:$0xff]
        %v257 = vld [vmem:[%s1 + $0x30] sm:$0xff]
        %v258 = vld [vmem:[%s1 + $0x38] sm:$0xff]
        %v259 = vld [vmem:[%s1 + $0x40] sm:$0xff]
        %v260 = vld [vmem:[%s1 + $0x48] sm:$0xff]
        %v261 = vld [vmem:[%s1 + $0x50] sm:$0xff]
        %v262 = vld [vmem:[%s1 + $0x58] sm:$0xff]
        %v263 = vld [vmem:[%s1 + $0x60] sm:$0xff]
        %v264 = vld [vmem:[%s1 + $0x68] sm:$0xff]
        %v265 = vld [vmem:[%s1 + $0x70] sm:$0xff]
        %v266 = vld [vmem:[%s1 + $0x78] sm:$0xff]
        %v267 = vld [vmem:[%s1 + $0x80] sm:$0xff]
        %v268 = vld [vmem:[%s1 + $0x88] sm:$0xff]
        %v269 = vld [vmem:[%s1 + $0x90] sm:$0xff]
        %v270 = vld [vmem:[%s1 + $0x98] sm:$0xff]
        %v271 = vld [vmem:[%s1 + $0xa0] sm:$0xff]
        %v272 = vld [vmem:[%s1 + $0xa8] sm:$0xff]
        %v273 = vld [vmem:[%s1 + $0xb0] sm:$0xff]
        %v274 = vld [vmem:[%s1 + $0xb8] sm:$0xff]
        %v275 = vld [vmem:[%s1 + $0xc0] sm:$0xff]
        %v276 = vld [vmem:[%s1 + $0xc8] sm:$0xff]
        %v277 = vld [vmem:[%s1 + $0xd0] sm:$0xff]
        %v278 = vld [vmem:[%s1 + $0xd8] sm:$0xff]
        %v279 = vld [vmem:[%s1 + $0xe0] sm:$0xff]
        %v280 = vld [vmem:[%s1 + $0xe8] sm:$0xff]
        %v281 = vld [vmem:[%s1 + $0xf0] sm:$0xff]
        %v282 = vld [vmem:[%s1 + $0xf8] sm:$0xff]
        %v283 = vld [vmem:[%s1 + $0x100] sm:$0xff]
        %v284 = vld [vmem:[%s1 + $0x108] sm:$0xff]
        %v285 = vld [vmem:[%s1 + $0x110] sm:$0xff]
        %v286 = vld [vmem:[%s1 + $0x118] sm:$0xff]
        %v287 = vld [vmem:[%s1 + $0x120] sm:$0xff]
        %v288 = vld [vmem:[%s1 + $0x128] sm:$0xff]
        %v289 = vld [vmem:[%s1 + $0x130] sm:$0xff]
        %v290 = vld [vmem:[%s1 + $0x138] sm:$0xff]
        %v291 = vld [vmem:[%s1 + $0x140] sm:$0xff]
        %v292 = vld [vmem:[%s1 + $0x148] sm:$0xff]
        %v293 = vld [vmem:[%s1 + $0x150] sm:$0xff]
        %v294 = vld [vmem:[%s1 + $0x158] sm:$0xff]
        %v295 = vld [vmem:[%s1 + $0x160] sm:$0xff]
        %v296 = vld [vmem:[%s1 + $0x168] sm:$0xff]
        %v297 = vld [vmem:[%s1 + $0x170] sm:$0xff]
        %v298 = vld [vmem:[%s1 + $0x178] sm:$0xff]
        %v300 = vcombine.high %v250, %v250
        %vm301 = vcmask 31744
        %v303 = vsel %vm301, %v251, 0
        %v306 = vsel %vm301, %v252, 0
        %v309 = vsel %vm301, %v253, 0
        %v312 = vsel %vm301, %v254, 0
        %v315 = vsel %vm301, %v255, 0
        %v318 = vsel %vm301, %v256, 0
        %v321 = vsel %vm301, %v257, 0
        %v324 = vsel %vm301, %v258, 0
        %v327 = vsel %vm301, %v259, 0
        %v330 = vsel %vm301, %v260, 0
        %v333 = vsel %vm301, %v261, 0
        %v336 = vsel %vm301, %v262, 0
        %v339 = vsel %vm301, %v263, 0
        %v342 = vsel %vm301, %v264, 0
        %v345 = vsel %vm301, %v265, 0
        %v348 = vsel %vm301, %v266, 0
        %v351 = vsel %vm301, %v267, 0
        %v354 = vsel %vm301, %v268, 0
        %v357 = vsel %vm301, %v269, 0
        %v360 = vsel %vm301, %v270, 0
        %v363 = vsel %vm301, %v271, 0
        %v366 = vsel %vm301, %v272, 0
        %v369 = vsel %vm301, %v273, 0
        %v372 = vsel %vm301, %v274, 0
        %v375 = vsel %vm301, %v275, 0
        %v378 = vsel %vm301, %v276, 0
        %v381 = vsel %vm301, %v277, 0
        %v384 = vsel %vm301, %v278, 0
        %v387 = vsel %vm301, %v279, 0
        %v390 = vsel %vm301, %v280, 0
        %v393 = vsel %vm301, %v281, 0
        %v396 = vsel %vm301, %v282, 0
        %v399 = vsel %vm301, %v283, 0
        %v402 = vsel %vm301, %v284, 0
        %v405 = vsel %vm301, %v285, 0
        %v408 = vsel %vm301, %v286, 0
        %v411 = vsel %vm301, %v287, 0
        %v414 = vsel %vm301, %v288, 0
        %v417 = vsel %vm301, %v289, 0
        %v420 = vsel %vm301, %v290, 0
        %v423 = vsel %vm301, %v291, 0
        %v426 = vsel %vm301, %v292, 0
        %v429 = vsel %vm301, %v293, 0
        %v432 = vsel %vm301, %v294, 0
        %v435 = vsel %vm301, %v295, 0
        %v438 = vsel %vm301, %v296, 0
        %v441 = vsel %vm301, %v297, 0
        %v444 = vsel %vm301, %v298, 0
        %vm446 = vcmask 1043456
        %v447 = vsel %vm446, %v250, 0
        %v449 = vsel %vm446, %v300, 0
        %451 = vmatprep.subr.mxu0 0.0
        %452 = vmatpush1.msra.mxu0 0.0
        %453 = vmatprep.subr.mxu0 0.0
        %454 = vmatpush1.msra.mxu0 0.0
        %455 = vmatprep.subr.mxu0 0.0
        %456 = vmatpush1.msra.mxu0 0.0
        %457 = vmatprep.subr.mxu0 0.0
        %458 = vmatpush1.msra.mxu0 0.0
        %459 = vmatprep.subr.mxu0 0.0
        %460 = vmatpush1.msra.mxu0 0.0
        %461 = vmatprep.subr.mxu0 0.0
        %462 = vmatpush1.msra.mxu0 0.0
        %463 = vmatprep.subr.mxu0 0.0
        %464 = vmatpush1.msra.mxu0 0.0
        %465 = vmatprep.subr.mxu0 0.0
        %466 = vmatpush1.msra.mxu0 0.0
        %467 = vmatprep.subr.mxu0 0.0
        %468 = vmatpush1.msra.mxu0 0.0
        %469 = vmatprep.subr.mxu0 0.0
        %470 = vmatpush1.msra.mxu0 0.0
        %471 = vmatprep.subr.mxu0 0.0
        %472 = vmatpush1.msra.mxu0 0.0
        %473 = vmatprep.subr.mxu0 0.0
        %474 = vmatpush1.msra.mxu0 0.0
        %475 = vmatprep.subr.mxu0 0.0
        %476 = vmatpush1.msra.mxu0 0.0
        %477 = vmatprep.subr.mxu0 0.0
        %478 = vmatpush1.msra.mxu0 0.0
        %479 = vmatprep.subr.mxu0 0.0
        %480 = vmatpush1.msra.mxu0 0.0
        %481 = vmatprep.subr.mxu0 %v449
        %482 = vmatpush1.msra.mxu0 %v447
        %483 = vmatprep.subr.mxu0 0.0
        %484 = vmatpush2.msra.mxu0 0.0
        %485 = vmatprep.subr.mxu0 0.0
        %486 = vmatpush2.msra.mxu0 0.0
        %487 = vmatprep.subr.mxu0 0.0
        %488 = vmatpush2.msra.mxu0 0.0
        %489 = vmatprep.subr.mxu0 0.0
        %490 = vmatpush2.msra.mxu0 0.0
        %491 = vmatprep.subr.mxu0 0.0
        %492 = vmatpush2.msra.mxu0 0.0
        %493 = vmatprep.subr.mxu0 0.0
        %494 = vmatpush2.msra.mxu0 0.0
        %495 = vmatprep.subr.mxu0 0.0
        %496 = vmatpush2.msra.mxu0 0.0
        %497 = vmatprep.subr.mxu0 0.0
        %498 = vmatpush2.msra.mxu0 0.0
        %499 = vmatprep.subr.mxu0 0.0
        %500 = vmatpush2.msra.mxu0 0.0
        %501 = vmatprep.subr.mxu0 0.0
        %502 = vmatpush2.msra.mxu0 0.0
        %503 = vmatprep.subr.mxu0 0.0
        %504 = vmatpush2.msra.mxu0 0.0
        %505 = vmatprep.subr.mxu0 0.0
        %506 = vmatpush2.msra.mxu0 0.0
        %507 = vmatprep.subr.mxu0 0.0
        %508 = vmatpush2.msra.mxu0 0.0
        %509 = vmatprep.subr.mxu0 0.0
        %510 = vmatpush2.msra.mxu0 0.0
        %511 = vmatprep.subr.mxu0 0.0
        %512 = vmatpush2.msra.mxu0 0.0
        %513 = vmatprep.subr.mxu0 0.0
        %514 = vmatpush2.msra.mxu0 0.0
        %515 = vmatprep.mubr.f32.mxu0 0.0
        %516 = vmatmul.mubr.f32.gmra.mxu0 %v303
        %v517 = vpop.f32.mrf.mxu0
        %v518 = vadd.f32 0.0, %v517
        %v519 = vpop.f32.mrf.mxu0
        %v520 = vadd.f32 0.0, %v519
        %521 = vmatprep.mubr.f32.mxu0 0.0
        %522 = vmatmul.mubr.f32.gmra.mxu0 %v306
        %v523 = vpop.f32.mrf.mxu0
        %v524 = vadd.f32 0.0, %v523
        %v525 = vpop.f32.mrf.mxu0
        %v526 = vadd.f32 0.0, %v525
        %527 = vmatprep.mubr.f32.mxu0 0.0
        %528 = vmatmul.mubr.f32.gmra.mxu0 %v309
        %v529 = vpop.f32.mrf.mxu0
        %v530 = vadd.f32 0.0, %v529
        %v531 = vpop.f32.mrf.mxu0
        %v532 = vadd.f32 0.0, %v531
        %533 = vmatprep.mubr.f32.mxu0 0.0
        %534 = vmatmul.mubr.f32.gmra.mxu0 %v312
        %v535 = vpop.f32.mrf.mxu0
        %v536 = vadd.f32 0.0, %v535
        %v537 = vpop.f32.mrf.mxu0
        %v538 = vadd.f32 0.0, %v537
        %539 = vmatprep.mubr.f32.mxu0 0.0
        %540 = vmatmul.mubr.f32.gmra.mxu0 %v315
        %v541 = vpop.f32.mrf.mxu0
        %v542 = vadd.f32 0.0, %v541
        %v543 = vpop.f32.mrf.mxu0
        %v544 = vadd.f32 0.0, %v543
        %545 = vmatprep.mubr.f32.mxu0 0.0
        %546 = vmatmul.mubr.f32.gmra.mxu0 %v318
        %v547 = vpop.f32.mrf.mxu0
        %v548 = vadd.f32 0.0, %v547
        %v549 = vpop.f32.mrf.mxu0
        %v550 = vadd.f32 0.0, %v549
        %551 = vmatprep.mubr.f32.mxu0 0.0
        %552 = vmatmul.mubr.f32.gmra.mxu0 %v321
        %v553 = vpop.f32.mrf.mxu0
        %v554 = vadd.f32 0.0, %v553
        %v555 = vpop.f32.mrf.mxu0
        %v556 = vadd.f32 0.0, %v555
        %557 = vmatprep.mubr.f32.mxu0 0.0
        %558 = vmatmul.mubr.f32.gmra.mxu0 %v324
        %v559 = vpop.f32.mrf.mxu0
        %v560 = vadd.f32 0.0, %v559
        %v561 = vpop.f32.mrf.mxu0
        %v562 = vadd.f32 0.0, %v561
        %563 = vmatprep.mubr.f32.mxu0 0.0
        %564 = vmatmul.mubr.f32.gmra.mxu0 %v327
        %v565 = vpop.f32.mrf.mxu0
        %v566 = vadd.f32 0.0, %v565
        %v567 = vpop.f32.mrf.mxu0
        %v568 = vadd.f32 0.0, %v567
        %569 = vmatprep.mubr.f32.mxu0 0.0
        %570 = vmatmul.mubr.f32.gmra.mxu0 %v330
        %v571 = vpop.f32.mrf.mxu0
        %v572 = vadd.f32 0.0, %v571
        %v573 = vpop.f32.mrf.mxu0
        %v574 = vadd.f32 0.0, %v573
        %575 = vmatprep.mubr.f32.mxu0 0.0
        %576 = vmatmul.mubr.f32.gmra.mxu0 %v333
        %v577 = vpop.f32.mrf.mxu0
        %v578 = vadd.f32 0.0, %v577
        %v579 = vpop.f32.mrf.mxu0
        %v580 = vadd.f32 0.0, %v579
        %581 = vmatprep.mubr.f32.mxu0 0.0
        %582 = vmatmul.mubr.f32.gmra.mxu0 %v336
        %v583 = vpop.f32.mrf.mxu0
        %v584 = vadd.f32 0.0, %v583
        %v585 = vpop.f32.mrf.mxu0
        %v586 = vadd.f32 0.0, %v585
        %587 = vmatprep.mubr.f32.mxu0 0.0
        %588 = vmatmul.mubr.f32.gmra.mxu0 %v339
        %v589 = vpop.f32.mrf.mxu0
        %v590 = vadd.f32 0.0, %v589
        %v591 = vpop.f32.mrf.mxu0
        %v592 = vadd.f32 0.0, %v591
        %593 = vmatprep.mubr.f32.mxu0 0.0
        %594 = vmatmul.mubr.f32.gmra.mxu0 %v342
        %v595 = vpop.f32.mrf.mxu0
        %v596 = vadd.f32 0.0, %v595
        %v597 = vpop.f32.mrf.mxu0
        %v598 = vadd.f32 0.0, %v597
        %599 = vmatprep.mubr.f32.mxu0 0.0
        %600 = vmatmul.mubr.f32.gmra.mxu0 %v345
        %v601 = vpop.f32.mrf.mxu0
        %v602 = vadd.f32 0.0, %v601
        %v603 = vpop.f32.mrf.mxu0
        %v604 = vadd.f32 0.0, %v603
        %605 = vmatprep.mubr.f32.mxu0 0.0
        %606 = vmatmul.mubr.f32.gmra.mxu0 %v348
        %v607 = vpop.f32.mrf.mxu0
        %v608 = vadd.f32 0.0, %v607
        %v609 = vpop.f32.mrf.mxu0
        %v610 = vadd.f32 0.0, %v609
        %611 = vmatprep.mubr.f32.mxu0 0.0
        %612 = vmatmul.mubr.f32.gmra.mxu0 %v351
        %v613 = vpop.f32.mrf.mxu0
        %v614 = vadd.f32 0.0, %v613
        %v615 = vpop.f32.mrf.mxu0
        %v616 = vadd.f32 0.0, %v615
        %617 = vmatprep.mubr.f32.mxu0 0.0
        %618 = vmatmul.mubr.f32.gmra.mxu0 %v354
        %v619 = vpop.f32.mrf.mxu0
        %v620 = vadd.f32 0.0, %v619
        %v621 = vpop.f32.mrf.mxu0
        %v622 = vadd.f32 0.0, %v621
        %623 = vmatprep.mubr.f32.mxu0 0.0
        %624 = vmatmul.mubr.f32.gmra.mxu0 %v357
        %v625 = vpop.f32.mrf.mxu0
        %v626 = vadd.f32 0.0, %v625
        %v627 = vpop.f32.mrf.mxu0
        %v628 = vadd.f32 0.0, %v627
        %629 = vmatprep.mubr.f32.mxu0 0.0
        %630 = vmatmul.mubr.f32.gmra.mxu0 %v360
        %v631 = vpop.f32.mrf.mxu0
        %v632 = vadd.f32 0.0, %v631
        %v633 = vpop.f32.mrf.mxu0
        %v634 = vadd.f32 0.0, %v633
        %635 = vmatprep.mubr.f32.mxu0 0.0
        %636 = vmatmul.mubr.f32.gmra.mxu0 %v363
        %v637 = vpop.f32.mrf.mxu0
        %v638 = vadd.f32 0.0, %v637
        %v639 = vpop.f32.mrf.mxu0
        %v640 = vadd.f32 0.0, %v639
        %641 = vmatprep.mubr.f32.mxu0 0.0
        %642 = vmatmul.mubr.f32.gmra.mxu0 %v366
        %v643 = vpop.f32.mrf.mxu0
        %v644 = vadd.f32 0.0, %v643
        %v645 = vpop.f32.mrf.mxu0
        %v646 = vadd.f32 0.0, %v645
        %647 = vmatprep.mubr.f32.mxu0 0.0
        %648 = vmatmul.mubr.f32.gmra.mxu0 %v369
        %v649 = vpop.f32.mrf.mxu0
        %v650 = vadd.f32 0.0, %v649
        %v651 = vpop.f32.mrf.mxu0
        %v652 = vadd.f32 0.0, %v651
        %653 = vmatprep.mubr.f32.mxu0 0.0
        %654 = vmatmul.mubr.f32.gmra.mxu0 %v372
        %v655 = vpop.f32.mrf.mxu0
        %v656 = vadd.f32 0.0, %v655
        %v657 = vpop.f32.mrf.mxu0
        %v658 = vadd.f32 0.0, %v657
        %659 = vmatprep.mubr.f32.mxu0 0.0
        %660 = vmatmul.mubr.f32.gmra.mxu0 %v375
        %v661 = vpop.f32.mrf.mxu0
        %v662 = vadd.f32 0.0, %v661
        %v663 = vpop.f32.mrf.mxu0
        %v664 = vadd.f32 0.0, %v663
        %665 = vmatprep.mubr.f32.mxu0 0.0
        %666 = vmatmul.mubr.f32.gmra.mxu0 %v378
        %v667 = vpop.f32.mrf.mxu0
        %v668 = vadd.f32 0.0, %v667
        %v669 = vpop.f32.mrf.mxu0
        %v670 = vadd.f32 0.0, %v669
        %671 = vmatprep.mubr.f32.mxu0 0.0
        %672 = vmatmul.mubr.f32.gmra.mxu0 %v381
        %v673 = vpop.f32.mrf.mxu0
        %v674 = vadd.f32 0.0, %v673
        %v675 = vpop.f32.mrf.mxu0
        %v676 = vadd.f32 0.0, %v675
        %677 = vmatprep.mubr.f32.mxu0 0.0
        %678 = vmatmul.mubr.f32.gmra.mxu0 %v384
        %v679 = vpop.f32.mrf.mxu0
        %v680 = vadd.f32 0.0, %v679
        %v681 = vpop.f32.mrf.mxu0
        %v682 = vadd.f32 0.0, %v681
        %683 = vmatprep.mubr.f32.mxu0 0.0
        %684 = vmatmul.mubr.f32.gmra.mxu0 %v387
        %v685 = vpop.f32.mrf.mxu0
        %v686 = vadd.f32 0.0, %v685
        %v687 = vpop.f32.mrf.mxu0
        %v688 = vadd.f32 0.0, %v687
        %689 = vmatprep.mubr.f32.mxu0 0.0
        %690 = vmatmul.mubr.f32.gmra.mxu0 %v390
        %v691 = vpop.f32.mrf.mxu0
        %v692 = vadd.f32 0.0, %v691
        %v693 = vpop.f32.mrf.mxu0
        %v694 = vadd.f32 0.0, %v693
        %695 = vmatprep.mubr.f32.mxu0 0.0
        %696 = vmatmul.mubr.f32.gmra.mxu0 %v393
        %v697 = vpop.f32.mrf.mxu0
        %v698 = vadd.f32 0.0, %v697
        %v699 = vpop.f32.mrf.mxu0
        %v700 = vadd.f32 0.0, %v699
        %701 = vmatprep.mubr.f32.mxu0 0.0
        %702 = vmatmul.mubr.f32.gmra.mxu0 %v396
        %v703 = vpop.f32.mrf.mxu0
        %v704 = vadd.f32 0.0, %v703
        %v705 = vpop.f32.mrf.mxu0
        %v706 = vadd.f32 0.0, %v705
        %707 = vmatprep.mubr.f32.mxu0 0.0
        %708 = vmatmul.mubr.f32.gmra.mxu0 %v399
        %v709 = vpop.f32.mrf.mxu0
        %v710 = vadd.f32 0.0, %v709
        %v711 = vpop.f32.mrf.mxu0
        %v712 = vadd.f32 0.0, %v711
        %713 = vmatprep.mubr.f32.mxu0 0.0
        %714 = vmatmul.mubr.f32.gmra.mxu0 %v402
        %v715 = vpop.f32.mrf.mxu0
        %v716 = vadd.f32 0.0, %v715
        %v717 = vpop.f32.mrf.mxu0
        %v718 = vadd.f32 0.0, %v717
        %719 = vmatprep.mubr.f32.mxu0 0.0
        %720 = vmatmul.mubr.f32.gmra.mxu0 %v405
        %v721 = vpop.f32.mrf.mxu0
        %v722 = vadd.f32 0.0, %v721
        %v723 = vpop.f32.mrf.mxu0
        %v724 = vadd.f32 0.0, %v723
        %725 = vmatprep.mubr.f32.mxu0 0.0
        %726 = vmatmul.mubr.f32.gmra.mxu0 %v408
        %v727 = vpop.f32.mrf.mxu0
        %v728 = vadd.f32 0.0, %v727
        %v729 = vpop.f32.mrf.mxu0
        %v730 = vadd.f32 0.0, %v729
        %731 = vmatprep.mubr.f32.mxu0 0.0
        %732 = vmatmul.mubr.f32.gmra.mxu0 %v411
        %v733 = vpop.f32.mrf.mxu0
        %v734 = vadd.f32 0.0, %v733
        %v735 = vpop.f32.mrf.mxu0
        %v736 = vadd.f32 0.0, %v735
        %737 = vmatprep.mubr.f32.mxu0 0.0
        %738 = vmatmul.mubr.f32.gmra.mxu0 %v414
        %v739 = vpop.f32.mrf.mxu0
        %v740 = vadd.f32 0.0, %v739
        %v741 = vpop.f32.mrf.mxu0
        %v742 = vadd.f32 0.0, %v741
        %743 = vmatprep.mubr.f32.mxu0 0.0
        %744 = vmatmul.mubr.f32.gmra.mxu0 %v417
        %v745 = vpop.f32.mrf.mxu0
        %v746 = vadd.f32 0.0, %v745
        %v747 = vpop.f32.mrf.mxu0
        %v748 = vadd.f32 0.0, %v747
        %749 = vmatprep.mubr.f32.mxu0 0.0
        %750 = vmatmul.mubr.f32.gmra.mxu0 %v420
        %v751 = vpop.f32.mrf.mxu0
        %v752 = vadd.f32 0.0, %v751
        %v753 = vpop.f32.mrf.mxu0
        %v754 = vadd.f32 0.0, %v753
        %755 = vmatprep.mubr.f32.mxu0 0.0
        %756 = vmatmul.mubr.f32.gmra.mxu0 %v423
        %v757 = vpop.f32.mrf.mxu0
        %v758 = vadd.f32 0.0, %v757
        %v759 = vpop.f32.mrf.mxu0
        %v760 = vadd.f32 0.0, %v759
        %761 = vmatprep.mubr.f32.mxu0 0.0
        %762 = vmatmul.mubr.f32.gmra.mxu0 %v426
        %v763 = vpop.f32.mrf.mxu0
        %v764 = vadd.f32 0.0, %v763
        %v765 = vpop.f32.mrf.mxu0
        %v766 = vadd.f32 0.0, %v765
        %767 = vmatprep.mubr.f32.mxu0 0.0
        %768 = vmatmul.mubr.f32.gmra.mxu0 %v429
        %v769 = vpop.f32.mrf.mxu0
        %v770 = vadd.f32 0.0, %v769
        %v771 = vpop.f32.mrf.mxu0
        %v772 = vadd.f32 0.0, %v771
        %773 = vmatprep.mubr.f32.mxu0 0.0
        %774 = vmatmul.mubr.f32.gmra.mxu0 %v432
        %v775 = vpop.f32.mrf.mxu0
        %v776 = vadd.f32 0.0, %v775
        %v777 = vpop.f32.mrf.mxu0
        %v778 = vadd.f32 0.0, %v777
        %779 = vmatprep.mubr.f32.mxu0 0.0
        %780 = vmatmul.mubr.f32.gmra.mxu0 %v435
        %v781 = vpop.f32.mrf.mxu0
        %v782 = vadd.f32 0.0, %v781
        %v783 = vpop.f32.mrf.mxu0
        %v784 = vadd.f32 0.0, %v783
        %785 = vmatprep.mubr.f32.mxu0 0.0
        %786 = vmatmul.mubr.f32.gmra.mxu0 %v438
        %v787 = vpop.f32.mrf.mxu0
        %v788 = vadd.f32 0.0, %v787
        %v789 = vpop.f32.mrf.mxu0
        %v790 = vadd.f32 0.0, %v789
        %791 = vmatprep.mubr.f32.mxu0 0.0
        %792 = vmatmul.mubr.f32.gmra.mxu0 %v441
        %v793 = vpop.f32.mrf.mxu0
        %v794 = vadd.f32 0.0, %v793
        %v795 = vpop.f32.mrf.mxu0
        %v796 = vadd.f32 0.0, %v795
        %797 = vmatprep.mubr.f32.mxu0 0.0
        %798 = vmatmul.mubr.f32.gmra.mxu0 %v444
        %v799 = vpop.f32.mrf.mxu0
        %v800 = vadd.f32 0.0, %v799
        %v801 = vpop.f32.mrf.mxu0
        %v802 = vadd.f32 0.0, %v801
        %803 = vdwg.mxu0
        %v804 = vmax.f32 %v518, %v530
        %v805 = vmax.f32 %v524, %v536
        %v806 = vmax.f32 %v804, %v805
        %v807 = vrot.slane %v806, 4
        %v808 = vmax.f32 %v806, %v807
        %v809 = vrot.slane %v808, 2
        %v810 = vmax.f32 %v808, %v809
        %v811 = vrot.slane %v810, 1
        %v812 = vmax.f32 %v810, %v811
        %v813 = vmax.f32 %v520, %v532
        %v814 = vmax.f32 %v526, %v538
        %v815 = vmax.f32 %v813, %v814
        %v816 = vrot.slane %v815, 4
        %v817 = vmax.f32 %v815, %v816
        %v818 = vrot.slane %v817, 2
        %v819 = vmax.f32 %v817, %v818
        %v820 = vrot.slane %v819, 1
        %v821 = vmax.f32 %v819, %v820
        %v822 = vsub.f32 %v518, %v812
        %v823 = vsub.f32 %v520, %v821
        %v824 = vsub.f32 %v524, %v812
        %v825 = vsub.f32 %v526, %v821
        %v826 = vsub.f32 %v530, %v812
        %v827 = vsub.f32 %v532, %v821
        %v828 = vsub.f32 %v536, %v812
        %v829 = vsub.f32 %v538, %v821
        %v830 = vmul.f32 %v822, 1.442695
        %v831 = vpow.pop %v830
        %v832 = vmul.f32 %v823, 1.442695
        %v833 = vpow.pop %v832
        %v834 = vmul.f32 %v824, 1.442695
        %v835 = vpow.pop %v834
        %v836 = vmul.f32 %v825, 1.442695
        %v837 = vpow.pop %v836
        %v838 = vmul.f32 %v826, 1.442695
        %v839 = vpow.pop %v838
        %v840 = vmul.f32 %v827, 1.442695
        %v841 = vpow.pop %v840
        %v842 = vmul.f32 %v828, 1.442695
        %v843 = vpow.pop %v842
        %v844 = vmul.f32 %v829, 1.442695
        %v845 = vpow.pop %v844
        %v846 = vadd.f32 %v831, %v835
        %v847 = vadd.f32 %v846, %v839
        %v848 = vadd.f32 %v847, %v843
        %v849 = vrot.slane %v848, 4
        %v850 = vadd.f32 %v848, %v849
        %v851 = vrot.slane %v850, 2
        %v852 = vadd.f32 %v850, %v851
        %v853 = vrot.slane %v852, 1
        %v854 = vadd.f32 %v852, %v853
        %v855 = vadd.f32 %v833, %v837
        %v856 = vadd.f32 %v855, %v841
        %v857 = vadd.f32 %v856, %v845
        %v858 = vrot.slane %v857, 4
        %v859 = vadd.f32 %v857, %v858
        %v860 = vrot.slane %v859, 2
        %v861 = vadd.f32 %v859, %v860
        %v862 = vrot.slane %v861, 1
        %v863 = vadd.f32 %v861, %v862
        %v864 = vrcp.pop %v854
        %v865 = vmul.f32 0.17677669, %v864
        %v866 = vrcp.pop %v863
        %v867 = vmul.f32 0.17677669, %v866
        %v868 = vmul.f32 %v831, %v865
        %v869 = vmul.f32 %v833, %v867
        %v870 = vmul.f32 %v835, %v865
        %v871 = vmul.f32 %v837, %v867
        %v872 = vmul.f32 %v839, %v865
        %v873 = vmul.f32 %v841, %v867
        %v874 = vmul.f32 %v843, %v865
        %v875 = vmul.f32 %v845, %v867
        %v876 = vmax.f32 %v614, %v616
        %877 = vmax.xlane.f32.xlu0 %v876
        %v878 = vpop.xlane.xlu0 %877
        %v879 = vmax.f32 %v620, %v622
        %880 = vmax.xlane.f32.xlu0 %v879
        %v881 = vpop.xlane.xlu0 %880
        %v882 = vmax.f32 %v626, %v628
        %883 = vmax.xlane.f32.xlu0 %v882
        %v884 = vpop.xlane.xlu0 %883
        %v885 = vmax.f32 %v632, %v634
        %886 = vmax.xlane.f32.xlu0 %v885
        %v887 = vpop.xlane.xlu0 %886
        %v888 = vsub.f32 %v614, %v878
        %v889 = vsub.f32 %v616, %v878
        %v890 = vsub.f32 %v620, %v881
        %v891 = vsub.f32 %v622, %v881
        %v892 = vsub.f32 %v626, %v884
        %v893 = vsub.f32 %v628, %v884
        %v894 = vsub.f32 %v632, %v887
        %v895 = vsub.f32 %v634, %v887
        %v896 = vmul.f32 %v888, 1.442695
        %v897 = vpow.pop %v896
        %v898 = vmul.f32 %v889, 1.442695
        %v899 = vpow.pop %v898
        %v900 = vmul.f32 %v890, 1.442695
        %v901 = vpow.pop %v900
        %v902 = vmul.f32 %v891, 1.442695
        %v903 = vpow.pop %v902
        %v904 = vmul.f32 %v892, 1.442695
        %v905 = vpow.pop %v904
        %v906 = vmul.f32 %v893, 1.442695
        %v907 = vpow.pop %v906
        %v908 = vmul.f32 %v894, 1.442695
        %v909 = vpow.pop %v908
        %v910 = vmul.f32 %v895, 1.442695
        %v911 = vpow.pop %v910
        %v912 = vadd.f32 %v897, %v899
        %913 = vadd.xlane.f32.xlu0 %v912
        %v914 = vpop.xlane.xlu0 %913
        %v915 = vadd.f32 %v901, %v903
        %916 = vadd.xlane.f32.xlu0 %v915
        %v917 = vpop.xlane.xlu0 %916
        %v918 = vadd.f32 %v905, %v907
        %919 = vadd.xlane.f32.xlu0 %v918
        %v920 = vpop.xlane.xlu0 %919
        %v921 = vadd.f32 %v909, %v911
        %922 = vadd.xlane.f32.xlu0 %v921
        %v923 = vpop.xlane.xlu0 %922
        %v924 = vrcp.pop %v914
        %v925 = vmul.f32 %v897, %v924
        %v926 = vmul.f32 %v899, %v924
        %v927 = vrcp.pop %v917
        %v928 = vmul.f32 %v901, %v927
        %v929 = vmul.f32 %v903, %v927
        %v930 = vrcp.pop %v920
        %v931 = vmul.f32 %v905, %v930
        %v932 = vmul.f32 %v907, %v930
        %v933 = vrcp.pop %v923
        %v934 = vmul.f32 %v909, %v933
        %v935 = vmul.f32 %v911, %v933
        %936 = vmatprep.subr.mxu0 0.0
        %937 = vmatpush1.xpose.msra.mxu0 0.0
        %938 = vmatprep.subr.mxu0 0.0
        %939 = vmatpush1.xpose.msra.mxu0 0.0
        %940 = vmatprep.subr.mxu0 0.0
        %941 = vmatpush1.xpose.msra.mxu0 0.0
        %942 = vmatprep.subr.mxu0 0.0
        %943 = vmatpush1.xpose.msra.mxu0 0.0
        %944 = vmatprep.subr.mxu0 0.0
        %945 = vmatpush1.xpose.msra.mxu0 0.0
        %946 = vmatprep.subr.mxu0 0.0
        %947 = vmatpush1.xpose.msra.mxu0 0.0
        %948 = vmatprep.subr.mxu0 0.0
        %949 = vmatpush1.xpose.msra.mxu0 0.0
        %950 = vmatprep.subr.mxu0 0.0
        %951 = vmatpush1.xpose.msra.mxu0 0.0
        %952 = vmatprep.subr.mxu0 0.0
        %953 = vmatpush1.xpose.msra.mxu0 0.0
        %954 = vmatprep.subr.mxu0 0.0
        %955 = vmatpush1.xpose.msra.mxu0 0.0
        %956 = vmatprep.subr.mxu0 0.0
        %957 = vmatpush1.xpose.msra.mxu0 0.0
        %958 = vmatprep.subr.mxu0 0.0
        %959 = vmatpush1.xpose.msra.mxu0 0.0
        %960 = vmatprep.subr.mxu0 %v935
        %961 = vmatpush1.xpose.msra.mxu0 %v934
        %962 = vmatprep.subr.mxu0 %v932
        %963 = vmatpush1.xpose.msra.mxu0 %v931
        %964 = vmatprep.subr.mxu0 %v929
        %965 = vmatpush1.xpose.msra.mxu0 %v928
        %966 = vmatprep.subr.mxu0 %v926
        %967 = vmatpush1.xpose.msra.mxu0 %v925
        %968 = vmatprep.subr.mxu0 0.0
        %969 = vmatpush2.xpose.msra.mxu0 0.0
        %970 = vmatprep.subr.mxu0 0.0
        %971 = vmatpush2.xpose.msra.mxu0 0.0
        %972 = vmatprep.subr.mxu0 0.0
        %973 = vmatpush2.xpose.msra.mxu0 0.0
        %974 = vmatprep.subr.mxu0 0.0
        %975 = vmatpush2.xpose.msra.mxu0 0.0
        %976 = vmatprep.subr.mxu0 0.0
        %977 = vmatpush2.xpose.msra.mxu0 0.0
        %978 = vmatprep.subr.mxu0 0.0
        %979 = vmatpush2.xpose.msra.mxu0 0.0
        %980 = vmatprep.subr.mxu0 0.0
        %981 = vmatpush2.xpose.msra.mxu0 0.0
        %982 = vmatprep.subr.mxu0 0.0
        %983 = vmatpush2.xpose.msra.mxu0 0.0
        %984 = vmatprep.subr.mxu0 0.0
        %985 = vmatpush2.xpose.msra.mxu0 0.0
        %986 = vmatprep.subr.mxu0 0.0
        %987 = vmatpush2.xpose.msra.mxu0 0.0
        %988 = vmatprep.subr.mxu0 0.0
        %989 = vmatpush2.xpose.msra.mxu0 0.0
        %990 = vmatprep.subr.mxu0 0.0
        %991 = vmatpush2.xpose.msra.mxu0 0.0
        %992 = vmatprep.subr.mxu0 0.0
        %993 = vmatpush2.xpose.msra.mxu0 0.0
        %994 = vmatprep.subr.mxu0 0.0
        %995 = vmatpush2.xpose.msra.mxu0 0.0
        %996 = vmatprep.subr.mxu0 0.0
        %997 = vmatpush2.xpose.msra.mxu0 0.0
        %998 = vmatprep.subr.mxu0 0.0
        %999 = vmatpush2.xpose.msra.mxu0 0.0
        %1000 = vmatprep.mubr.f32.mxu0 %v712
        %1001 = vmatmul.mubr.f32.gmra.mxu0 %v710
        %v1002 = vpop.f32.mrf.mxu0
        %v1003 = vadd.f32 0.0, %v1002
        %v1004 = vpop.f32.mrf.mxu0
        %1005 = vmatprep.mubr.f32.mxu0 %v718
        %1006 = vmatmul.mubr.f32.gmra.mxu0 %v716
        %v1007 = vpop.f32.mrf.mxu0
        %v1008 = vadd.f32 0.0, %v1007
        %v1009 = vpop.f32.mrf.mxu0
        %1010 = vmatprep.mubr.f32.mxu0 %v724
        %1011 = vmatmul.mubr.f32.gmra.mxu0 %v722
        %v1012 = vpop.f32.mrf.mxu0
        %v1013 = vadd.f32 0.0, %v1012
        %v1014 = vpop.f32.mrf.mxu0
        %1015 = vmatprep.mubr.f32.mxu0 %v730
        %1016 = vmatmul.mubr.f32.gmra.mxu0 %v728
        %v1017 = vpop.f32.mrf.mxu0
        %v1018 = vadd.f32 0.0, %v1017
        %v1019 = vpop.f32.mrf.mxu0
        %1020 = vdwg.mxu0
        %vm1021 = vcmask 261120
        %v1023 = vsel %vm1021, %v1003, 0
        %v1026 = vsel %vm1021, %v1008, 0
        %v1029 = vsel %vm1021, %v1013, 0
        %v1032 = vsel %vm1021, %v1018, 0
        %1034 = vmatprep.subr.mxu0 0.0
        %1035 = vmatpush1.msra.mxu0 0.0
        %1036 = vmatprep.subr.mxu0 0.0
        %1037 = vmatpush1.msra.mxu0 0.0
        %1038 = vmatprep.subr.mxu0 0.0
        %1039 = vmatpush1.msra.mxu0 0.0
        %1040 = vmatprep.subr.mxu0 0.0
        %1041 = vmatpush1.msra.mxu0 0.0
        %1042 = vmatprep.subr.mxu0 0.0
        %1043 = vmatpush1.msra.mxu0 0.0
        %1044 = vmatprep.subr.mxu0 0.0
        %1045 = vmatpush1.msra.mxu0 0.0
        %1046 = vmatprep.subr.mxu0 0.0
        %1047 = vmatpush1.msra.mxu0 0.0
        %1048 = vmatprep.subr.mxu0 0.0
        %1049 = vmatpush1.msra.mxu0 0.0
        %1050 = vmatprep.subr.mxu0 0.0
        %1051 = vmatpush1.msra.mxu0 0.0
        %1052 = vmatprep.subr.mxu0 0.0
        %1053 = vmatpush1.msra.mxu0 0.0
        %1054 = vmatprep.subr.mxu0 0.0
        %1055 = vmatpush1.msra.mxu0 0.0
        %1056 = vmatprep.subr.mxu0 0.0
        %1057 = vmatpush1.msra.mxu0 0.0
        %1058 = vmatprep.subr.mxu0 %v875
        %1059 = vmatpush1.msra.mxu0 %v874
        %1060 = vmatprep.subr.mxu0 %v873
        %1061 = vmatpush1.msra.mxu0 %v872
        %1062 = vmatprep.subr.mxu0 %v871
        %1063 = vmatpush1.msra.mxu0 %v870
        %1064 = vmatprep.subr.mxu0 %v869
        %1065 = vmatpush1.msra.mxu0 %v868
        %1066 = vmatprep.subr.mxu0 0.0
        %1067 = vmatpush2.msra.mxu0 0.0
        %1068 = vmatprep.subr.mxu0 0.0
        %1069 = vmatpush2.msra.mxu0 0.0
        %1070 = vmatprep.subr.mxu0 0.0
        %1071 = vmatpush2.msra.mxu0 0.0
        %1072 = vmatprep.subr.mxu0 0.0
        %1073 = vmatpush2.msra.mxu0 0.0
        %1074 = vmatprep.subr.mxu0 0.0
        %1075 = vmatpush2.msra.mxu0 0.0
        %1076 = vmatprep.subr.mxu0 0.0
        %1077 = vmatpush2.msra.mxu0 0.0
        %1078 = vmatprep.subr.mxu0 0.0
        %1079 = vmatpush2.msra.mxu0 0.0
        %1080 = vmatprep.subr.mxu0 0.0
        %1081 = vmatpush2.msra.mxu0 0.0
        %1082 = vmatprep.subr.mxu0 0.0
        %1083 = vmatpush2.msra.mxu0 0.0
        %1084 = vmatprep.subr.mxu0 0.0
        %1085 = vmatpush2.msra.mxu0 0.0
        %1086 = vmatprep.subr.mxu0 0.0
        %1087 = vmatpush2.msra.mxu0 0.0
        %1088 = vmatprep.subr.mxu0 0.0
        %1089 = vmatpush2.msra.mxu0 0.0
        %1090 = vmatprep.subr.mxu0 0.0
        %1091 = vmatpush2.msra.mxu0 0.0
        %1092 = vmatprep.subr.mxu0 0.0
        %1093 = vmatpush2.msra.mxu0 0.0
        %1094 = vmatprep.subr.mxu0 0.0
        %1095 = vmatpush2.msra.mxu0 0.0
        %1096 = vmatprep.subr.mxu0 0.0
        %1097 = vmatpush2.msra.mxu0 0.0
        %1098 = vmatprep.mubr.f32.mxu0 0.0
        %1099 = vmatmul.mubr.f32.gmra.mxu0 %v1023
        %v1100 = vpop.f32.mrf.mxu0
        %v1101 = vadd.f32 0.0, %v1100
        %v1102 = vpop.f32.mrf.mxu0
        %v1103 = vadd.f32 0.0, %v1102
        %1104 = vmatprep.mubr.f32.mxu0 0.0
        %1105 = vmatmul.mubr.f32.gmra.mxu0 %v1026
        %v1106 = vpop.f32.mrf.mxu0
        %v1107 = vadd.f32 0.0, %v1106
        %v1108 = vpop.f32.mrf.mxu0
        %v1109 = vadd.f32 0.0, %v1108
        %1110 = vmatprep.mubr.f32.mxu0 0.0
        %1111 = vmatmul.mubr.f32.gmra.mxu0 %v1029
        %v1112 = vpop.f32.mrf.mxu0
        %v1113 = vadd.f32 0.0, %v1112
        %v1114 = vpop.f32.mrf.mxu0
        %v1115 = vadd.f32 0.0, %v1114
        %1116 = vmatprep.mubr.f32.mxu0 0.0
        %1117 = vmatmul.mubr.f32.gmra.mxu0 %v1032
        %v1118 = vpop.f32.mrf.mxu0
        %v1119 = vadd.f32 0.0, %v1118
        %v1120 = vpop.f32.mrf.mxu0
        %v1121 = vadd.f32 0.0, %v1120
        %1122 = vdwg.mxu0
        %v1123 = vmax.f32 %v542, %v554
        %v1124 = vmax.f32 %v548, %v560
        %v1125 = vmax.f32 %v1123, %v1124
        %v1126 = vrot.slane %v1125, 4
        %v1127 = vmax.f32 %v1125, %v1126
        %v1128 = vrot.slane %v1127, 2
        %v1129 = vmax.f32 %v1127, %v1128
        %v1130 = vrot.slane %v1129, 1
        %v1131 = vmax.f32 %v1129, %v1130
        %v1132 = vmax.f32 %v544, %v556
        %v1133 = vmax.f32 %v550, %v562
        %v1134 = vmax.f32 %v1132, %v1133
        %v1135 = vrot.slane %v1134, 4
        %v1136 = vmax.f32 %v1134, %v1135
        %v1137 = vrot.slane %v1136, 2
        %v1138 = vmax.f32 %v1136, %v1137
        %v1139 = vrot.slane %v1138, 1
        %v1140 = vmax.f32 %v1138, %v1139
        %v1141 = vsub.f32 %v542, %v1131
        %v1142 = vsub.f32 %v544, %v1140
        %v1143 = vsub.f32 %v548, %v1131
        %v1144 = vsub.f32 %v550, %v1140
        %v1145 = vsub.f32 %v554, %v1131
        %v1146 = vsub.f32 %v556, %v1140
        %v1147 = vsub.f32 %v560, %v1131
        %v1148 = vsub.f32 %v562, %v1140
        %v1149 = vmul.f32 %v1141, 1.442695
        %v1150 = vpow.pop %v1149
        %v1151 = vmul.f32 %v1142, 1.442695
        %v1152 = vpow.pop %v1151
        %v1153 = vmul.f32 %v1143, 1.442695
        %v1154 = vpow.pop %v1153
        %v1155 = vmul.f32 %v1144, 1.442695
        %v1156 = vpow.pop %v1155
        %v1157 = vmul.f32 %v1145, 1.442695
        %v1158 = vpow.pop %v1157
        %v1159 = vmul.f32 %v1146, 1.442695
        %v1160 = vpow.pop %v1159
        %v1161 = vmul.f32 %v1147, 1.442695
        %v1162 = vpow.pop %v1161
        %v1163 = vmul.f32 %v1148, 1.442695
        %v1164 = vpow.pop %v1163
        %v1165 = vadd.f32 %v1150, %v1154
        %v1166 = vadd.f32 %v1165, %v1158
        %v1167 = vadd.f32 %v1166, %v1162
        %v1168 = vrot.slane %v1167, 4
        %v1169 = vadd.f32 %v1167, %v1168
        %v1170 = vrot.slane %v1169, 2
        %v1171 = vadd.f32 %v1169, %v1170
        %v1172 = vrot.slane %v1171, 1
        %v1173 = vadd.f32 %v1171, %v1172
        %v1174 = vadd.f32 %v1152, %v1156
        %v1175 = vadd.f32 %v1174, %v1160
        %v1176 = vadd.f32 %v1175, %v1164
        %v1177 = vrot.slane %v1176, 4
        %v1178 = vadd.f32 %v1176, %v1177
        %v1179 = vrot.slane %v1178, 2
        %v1180 = vadd.f32 %v1178, %v1179
        %v1181 = vrot.slane %v1180, 1
        %v1182 = vadd.f32 %v1180, %v1181
        %v1183 = vrcp.pop %v1173
        %v1184 = vmul.f32 0.17677669, %v1183
        %v1185 = vrcp.pop %v1182
        %v1186 = vmul.f32 0.17677669, %v1185
        %v1187 = vmul.f32 %v1150, %v1184
        %v1188 = vmul.f32 %v1152, %v1186
        %v1189 = vmul.f32 %v1154, %v1184
        %v1190 = vmul.f32 %v1156, %v1186
        %v1191 = vmul.f32 %v1158, %v1184
        %v1192 = vmul.f32 %v1160, %v1186
        %v1193 = vmul.f32 %v1162, %v1184
        %v1194 = vmul.f32 %v1164, %v1186
        %v1195 = vmax.f32 %v638, %v640
        %1196 = vmax.xlane.f32.xlu0 %v1195
        %v1197 = vpop.xlane.xlu0 %1196
        %v1198 = vmax.f32 %v644, %v646
        %1199 = vmax.xlane.f32.xlu0 %v1198
        %v1200 = vpop.xlane.xlu0 %1199
        %v1201 = vmax.f32 %v650, %v652
        %1202 = vmax.xlane.f32.xlu0 %v1201
        %v1203 = vpop.xlane.xlu0 %1202
        %v1204 = vmax.f32 %v656, %v658
        %1205 = vmax.xlane.f32.xlu0 %v1204
        %v1206 = vpop.xlane.xlu0 %1205
        %v1207 = vsub.f32 %v638, %v1197
        %v1208 = vsub.f32 %v640, %v1197
        %v1209 = vsub.f32 %v644, %v1200
        %v1210 = vsub.f32 %v646, %v1200
        %v1211 = vsub.f32 %v650, %v1203
        %v1212 = vsub.f32 %v652, %v1203
        %v1213 = vsub.f32 %v656, %v1206
        %v1214 = vsub.f32 %v658, %v1206
        %v1215 = vmul.f32 %v1207, 1.442695
        %v1216 = vpow.pop %v1215
        %v1217 = vmul.f32 %v1208, 1.442695
        %v1218 = vpow.pop %v1217
        %v1219 = vmul.f32 %v1209, 1.442695
        %v1220 = vpow.pop %v1219
        %v1221 = vmul.f32 %v1210, 1.442695
        %v1222 = vpow.pop %v1221
        %v1223 = vmul.f32 %v1211, 1.442695
        %v1224 = vpow.pop %v1223
        %v1225 = vmul.f32 %v1212, 1.442695
        %v1226 = vpow.pop %v1225
        %v1227 = vmul.f32 %v1213, 1.442695
        %v1228 = vpow.pop %v1227
        %v1229 = vmul.f32 %v1214, 1.442695
        %v1230 = vpow.pop %v1229
        %v1231 = vadd.f32 %v1216, %v1218
        %1232 = vadd.xlane.f32.xlu0 %v1231
        %v1233 = vpop.xlane.xlu0 %1232
        %v1234 = vadd.f32 %v1220, %v1222
        %1235 = vadd.xlane.f32.xlu0 %v1234
        %v1236 = vpop.xlane.xlu0 %1235
        %v1237 = vadd.f32 %v1224, %v1226
        %1238 = vadd.xlane.f32.xlu0 %v1237
        %v1239 = vpop.xlane.xlu0 %1238
        %v1240 = vadd.f32 %v1228, %v1230
        %1241 = vadd.xlane.f32.xlu0 %v1240
        %v1242 = vpop.xlane.xlu0 %1241
        %v1243 = vrcp.pop %v1233
        %v1244 = vmul.f32 %v1216, %v1243
        %v1245 = vmul.f32 %v1218, %v1243
        %v1246 = vrcp.pop %v1236
        %v1247 = vmul.f32 %v1220, %v1246
        %v1248 = vmul.f32 %v1222, %v1246
        %v1249 = vrcp.pop %v1239
        %v1250 = vmul.f32 %v1224, %v1249
        %v1251 = vmul.f32 %v1226, %v1249
        %v1252 = vrcp.pop %v1242
        %v1253 = vmul.f32 %v1228, %v1252
        %v1254 = vmul.f32 %v1230, %v1252
        %1255 = vmatprep.subr.mxu0 0.0
        %1256 = vmatpush1.xpose.msra.mxu0 0.0
        %1257 = vmatprep.subr.mxu0 0.0
        %1258 = vmatpush1.xpose.msra.mxu0 0.0
        %1259 = vmatprep.subr.mxu0 0.0
        %1260 = vmatpush1.xpose.msra.mxu0 0.0
        %1261 = vmatprep.subr.mxu0 0.0
        %1262 = vmatpush1.xpose.msra.mxu0 0.0
        %1263 = vmatprep.subr.mxu0 0.0
        %1264 = vmatpush1.xpose.msra.mxu0 0.0
        %1265 = vmatprep.subr.mxu0 0.0
        %1266 = vmatpush1.xpose.msra.mxu0 0.0
        %1267 = vmatprep.subr.mxu0 0.0
        %1268 = vmatpush1.xpose.msra.mxu0 0.0
        %1269 = vmatprep.subr.mxu0 0.0
        %1270 = vmatpush1.xpose.msra.mxu0 0.0
        %1271 = vmatprep.subr.mxu0 0.0
        %1272 = vmatpush1.xpose.msra.mxu0 0.0
        %1273 = vmatprep.subr.mxu0 0.0
        %1274 = vmatpush1.xpose.msra.mxu0 0.0
        %1275 = vmatprep.subr.mxu0 0.0
        %1276 = vmatpush1.xpose.msra.mxu0 0.0
        %1277 = vmatprep.subr.mxu0 0.0
        %1278 = vmatpush1.xpose.msra.mxu0 0.0
        %1279 = vmatprep.subr.mxu0 %v1254
        %1280 = vmatpush1.xpose.msra.mxu0 %v1253
        %1281 = vmatprep.subr.mxu0 %v1251
        %1282 = vmatpush1.xpose.msra.mxu0 %v1250
        %1283 = vmatprep.subr.mxu0 %v1248
        %1284 = vmatpush1.xpose.msra.mxu0 %v1247
        %1285 = vmatprep.subr.mxu0 %v1245
        %1286 = vmatpush1.xpose.msra.mxu0 %v1244
        %1287 = vmatprep.subr.mxu0 0.0
        %1288 = vmatpush2.xpose.msra.mxu0 0.0
        %1289 = vmatprep.subr.mxu0 0.0
        %1290 = vmatpush2.xpose.msra.mxu0 0.0
        %1291 = vmatprep.subr.mxu0 0.0
        %1292 = vmatpush2.xpose.msra.mxu0 0.0
        %1293 = vmatprep.subr.mxu0 0.0
        %1294 = vmatpush2.xpose.msra.mxu0 0.0
        %1295 = vmatprep.subr.mxu0 0.0
        %1296 = vmatpush2.xpose.msra.mxu0 0.0
        %1297 = vmatprep.subr.mxu0 0.0
        %1298 = vmatpush2.xpose.msra.mxu0 0.0
        %1299 = vmatprep.subr.mxu0 0.0
        %1300 = vmatpush2.xpose.msra.mxu0 0.0
        %1301 = vmatprep.subr.mxu0 0.0
        %1302 = vmatpush2.xpose.msra.mxu0 0.0
        %1303 = vmatprep.subr.mxu0 0.0
        %1304 = vmatpush2.xpose.msra.mxu0 0.0
        %1305 = vmatprep.subr.mxu0 0.0
        %1306 = vmatpush2.xpose.msra.mxu0 0.0
        %1307 = vmatprep.subr.mxu0 0.0
        %1308 = vmatpush2.xpose.msra.mxu0 0.0
        %1309 = vmatprep.subr.mxu0 0.0
        %1310 = vmatpush2.xpose.msra.mxu0 0.0
        %1311 = vmatprep.subr.mxu0 0.0
        %1312 = vmatpush2.xpose.msra.mxu0 0.0
        %1313 = vmatprep.subr.mxu0 0.0
        %1314 = vmatpush2.xpose.msra.mxu0 0.0
        %1315 = vmatprep.subr.mxu0 0.0
        %1316 = vmatpush2.xpose.msra.mxu0 0.0
        %1317 = vmatprep.subr.mxu0 0.0
        %1318 = vmatpush2.xpose.msra.mxu0 0.0
        %1319 = vmatprep.mubr.f32.mxu0 %v736
        %1320 = vmatmul.mubr.f32.gmra.mxu0 %v734
        %v1321 = vpop.f32.mrf.mxu0
        %v1322 = vadd.f32 0.0, %v1321
        %v1323 = vpop.f32.mrf.mxu0
        %1324 = vmatprep.mubr.f32.mxu0 %v742
        %1325 = vmatmul.mubr.f32.gmra.mxu0 %v740
        %v1326 = vpop.f32.mrf.mxu0
        %v1327 = vadd.f32 0.0, %v1326
        %v1328 = vpop.f32.mrf.mxu0
        %1329 = vmatprep.mubr.f32.mxu0 %v748
        %1330 = vmatmul.mubr.f32.gmra.mxu0 %v746
        %v1331 = vpop.f32.mrf.mxu0
        %v1332 = vadd.f32 0.0, %v1331
        %v1333 = vpop.f32.mrf.mxu0
        %1334 = vmatprep.mubr.f32.mxu0 %v754
        %1335 = vmatmul.mubr.f32.gmra.mxu0 %v752
        %v1336 = vpop.f32.mrf.mxu0
        %v1337 = vadd.f32 0.0, %v1336
        %v1338 = vpop.f32.mrf.mxu0
        %1339 = vdwg.mxu0
        %v1341 = vsel %vm1021, %v1322, 0
        %v1344 = vsel %vm1021, %v1327, 0
        %v1347 = vsel %vm1021, %v1332, 0
        %v1350 = vsel %vm1021, %v1337, 0
        %1352 = vmatprep.subr.mxu0 0.0
        %1353 = vmatpush1.msra.mxu0 0.0
        %1354 = vmatprep.subr.mxu0 0.0
        %1355 = vmatpush1.msra.mxu0 0.0
        %1356 = vmatprep.subr.mxu0 0.0
        %1357 = vmatpush1.msra.mxu0 0.0
        %1358 = vmatprep.subr.mxu0 0.0
        %1359 = vmatpush1.msra.mxu0 0.0
        %1360 = vmatprep.subr.mxu0 0.0
        %1361 = vmatpush1.msra.mxu0 0.0
        %1362 = vmatprep.subr.mxu0 0.0
        %1363 = vmatpush1.msra.mxu0 0.0
        %1364 = vmatprep.subr.mxu0 0.0
        %1365 = vmatpush1.msra.mxu0 0.0
        %1366 = vmatprep.subr.mxu0 0.0
        %1367 = vmatpush1.msra.mxu0 0.0
        %1368 = vmatprep.subr.mxu0 0.0
        %1369 = vmatpush1.msra.mxu0 0.0
        %1370 = vmatprep.subr.mxu0 0.0
        %1371 = vmatpush1.msra.mxu0 0.0
        %1372 = vmatprep.subr.mxu0 0.0
        %1373 = vmatpush1.msra.mxu0 0.0
        %1374 = vmatprep.subr.mxu0 0.0
        %1375 = vmatpush1.msra.mxu0 0.0
        %1376 = vmatprep.subr.mxu0 %v1194
        %1377 = vmatpush1.msra.mxu0 %v1193
        %1378 = vmatprep.subr.mxu0 %v1192
        %1379 = vmatpush1.msra.mxu0 %v1191
        %1380 = vmatprep.subr.mxu0 %v1190
        %1381 = vmatpush1.msra.mxu0 %v1189
        %1382 = vmatprep.subr.mxu0 %v1188
        %1383 = vmatpush1.msra.mxu0 %v1187
        %1384 = vmatprep.subr.mxu0 0.0
        %1385 = vmatpush2.msra.mxu0 0.0
        %1386 = vmatprep.subr.mxu0 0.0
        %1387 = vmatpush2.msra.mxu0 0.0
        %1388 = vmatprep.subr.mxu0 0.0
        %1389 = vmatpush2.msra.mxu0 0.0
        %1390 = vmatprep.subr.mxu0 0.0
        %1391 = vmatpush2.msra.mxu0 0.0
        %1392 = vmatprep.subr.mxu0 0.0
        %1393 = vmatpush2.msra.mxu0 0.0
        %1394 = vmatprep.subr.mxu0 0.0
        %1395 = vmatpush2.msra.mxu0 0.0
        %1396 = vmatprep.subr.mxu0 0.0
        %1397 = vmatpush2.msra.mxu0 0.0
        %1398 = vmatprep.subr.mxu0 0.0
        %1399 = vmatpush2.msra.mxu0 0.0
        %1400 = vmatprep.subr.mxu0 0.0
        %1401 = vmatpush2.msra.mxu0 0.0
        %1402 = vmatprep.subr.mxu0 0.0
        %1403 = vmatpush2.msra.mxu0 0.0
        %1404 = vmatprep.subr.mxu0 0.0
        %1405 = vmatpush2.msra.mxu0 0.0
        %1406 = vmatprep.subr.mxu0 0.0
        %1407 = vmatpush2.msra.mxu0 0.0
        %1408 = vmatprep.subr.mxu0 0.0
        %1409 = vmatpush2.msra.mxu0 0.0
        %1410 = vmatprep.subr.mxu0 0.0
        %1411 = vmatpush2.msra.mxu0 0.0
        %1412 = vmatprep.subr.mxu0 0.0
        %1413 = vmatpush2.msra.mxu0 0.0
        %1414 = vmatprep.subr.mxu0 0.0
        %1415 = vmatpush2.msra.mxu0 0.0
        %1416 = vmatprep.mubr.f32.mxu0 0.0
        %1417 = vmatmul.mubr.f32.gmra.mxu0 %v1341
        %v1418 = vpop.f32.mrf.mxu0
        %v1419 = vadd.f32 0.0, %v1418
        %v1420 = vpop.f32.mrf.mxu0
        %v1421 = vadd.f32 0.0, %v1420
        %1422 = vmatprep.mubr.f32.mxu0 0.0
        %1423 = vmatmul.mubr.f32.gmra.mxu0 %v1344
        %v1424 = vpop.f32.mrf.mxu0
        %v1425 = vadd.f32 0.0, %v1424
        %v1426 = vpop.f32.mrf.mxu0
        %v1427 = vadd.f32 0.0, %v1426
        %1428 = vmatprep.mubr.f32.mxu0 0.0
        %1429 = vmatmul.mubr.f32.gmra.mxu0 %v1347
        %v1430 = vpop.f32.mrf.mxu0
        %v1431 = vadd.f32 0.0, %v1430
        %v1432 = vpop.f32.mrf.mxu0
        %v1433 = vadd.f32 0.0, %v1432
        %1434 = vmatprep.mubr.f32.mxu0 0.0
        %1435 = vmatmul.mubr.f32.gmra.mxu0 %v1350
        %v1436 = vpop.f32.mrf.mxu0
        %v1437 = vadd.f32 0.0, %v1436
        %v1438 = vpop.f32.mrf.mxu0
        %v1439 = vadd.f32 0.0, %v1438
        %1440 = vdwg.mxu0
        %v1441 = vmax.f32 %v566, %v578
        %v1442 = vmax.f32 %v572, %v584
        %v1443 = vmax.f32 %v1441, %v1442
        %v1444 = vrot.slane %v1443, 4
        %v1445 = vmax.f32 %v1443, %v1444
        %v1446 = vrot.slane %v1445, 2
        %v1447 = vmax.f32 %v1445, %v1446
        %v1448 = vrot.slane %v1447, 1
        %v1449 = vmax.f32 %v1447, %v1448
        %v1450 = vmax.f32 %v568, %v580
        %v1451 = vmax.f32 %v574, %v586
        %v1452 = vmax.f32 %v1450, %v1451
        %v1453 = vrot.slane %v1452, 4
        %v1454 = vmax.f32 %v1452, %v1453
        %v1455 = vrot.slane %v1454, 2
        %v1456 = vmax.f32 %v1454, %v1455
        %v1457 = vrot.slane %v1456, 1
        %v1458 = vmax.f32 %v1456, %v1457
        %v1459 = vsub.f32 %v566, %v1449
        %v1460 = vsub.f32 %v568, %v1458
        %v1461 = vsub.f32 %v572, %v1449
        %v1462 = vsub.f32 %v574, %v1458
        %v1463 = vsub.f32 %v578, %v1449
        %v1464 = vsub.f32 %v580, %v1458
        %v1465 = vsub.f32 %v584, %v1449
        %v1466 = vsub.f32 %v586, %v1458
        %v1467 = vmul.f32 %v1459, 1.442695
        %v1468 = vpow.pop %v1467
        %v1469 = vmul.f32 %v1460, 1.442695
        %v1470 = vpow.pop %v1469
        %v1471 = vmul.f32 %v1461, 1.442695
        %v1472 = vpow.pop %v1471
        %v1473 = vmul.f32 %v1462, 1.442695
        %v1474 = vpow.pop %v1473
        %v1475 = vmul.f32 %v1463, 1.442695
        %v1476 = vpow.pop %v1475
        %v1477 = vmul.f32 %v1464, 1.442695
        %v1478 = vpow.pop %v1477
        %v1479 = vmul.f32 %v1465, 1.442695
        %v1480 = vpow.pop %v1479
        %v1481 = vmul.f32 %v1466, 1.442695
        %v1482 = vpow.pop %v1481
        %v1483 = vadd.f32 %v1468, %v1472
        %v1484 = vadd.f32 %v1483, %v1476
        %v1485 = vadd.f32 %v1484, %v1480
        %v1486 = vrot.slane %v1485, 4
        %v1487 = vadd.f32 %v1485, %v1486
        %v1488 = vrot.slane %v1487, 2
        %v1489 = vadd.f32 %v1487, %v1488
        %v1490 = vrot.slane %v1489, 1
        %v1491 = vadd.f32 %v1489, %v1490
        %v1492 = vadd.f32 %v1470, %v1474
        %v1493 = vadd.f32 %v1492, %v1478
        %v1494 = vadd.f32 %v1493, %v1482
        %v1495 = vrot.slane %v1494, 4
        %v1496 = vadd.f32 %v1494, %v1495
        %v1497 = vrot.slane %v1496, 2
        %v1498 = vadd.f32 %v1496, %v1497
        %v1499 = vrot.slane %v1498, 1
        %v1500 = vadd.f32 %v1498, %v1499
        %v1501 = vrcp.pop %v1491
        %v1502 = vmul.f32 0.17677669, %v1501
        %v1503 = vrcp.pop %v1500
        %v1504 = vmul.f32 0.17677669, %v1503
        %v1505 = vmul.f32 %v1468, %v1502
        %v1506 = vmul.f32 %v1470, %v1504
        %v1507 = vmul.f32 %v1472, %v1502
        %v1508 = vmul.f32 %v1474, %v1504
        %v1509 = vmul.f32 %v1476, %v1502
        %v1510 = vmul.f32 %v1478, %v1504
        %v1511 = vmul.f32 %v1480, %v1502
        %v1512 = vmul.f32 %v1482, %v1504
        %v1513 = vmax.f32 %v662, %v664
        %1514 = vmax.xlane.f32.xlu0 %v1513
        %v1515 = vpop.xlane.xlu0 %1514
        %v1516 = vmax.f32 %v668, %v670
        %1517 = vmax.xlane.f32.xlu0 %v1516
        %v1518 = vpop.xlane.xlu0 %1517
        %v1519 = vmax.f32 %v674, %v676
        %1520 = vmax.xlane.f32.xlu0 %v1519
        %v1521 = vpop.xlane.xlu0 %1520
        %v1522 = vmax.f32 %v680, %v682
        %1523 = vmax.xlane.f32.xlu0 %v1522
        %v1524 = vpop.xlane.xlu0 %1523
        %v1525 = vsub.f32 %v662, %v1515
        %v1526 = vsub.f32 %v664, %v1515
        %v1527 = vsub.f32 %v668, %v1518
        %v1528 = vsub.f32 %v670, %v1518
        %v1529 = vsub.f32 %v674, %v1521
        %v1530 = vsub.f32 %v676, %v1521
        %v1531 = vsub.f32 %v680, %v1524
        %v1532 = vsub.f32 %v682, %v1524
        %v1533 = vmul.f32 %v1525, 1.442695
        %v1534 = vpow.pop %v1533
        %v1535 = vmul.f32 %v1526, 1.442695
        %v1536 = vpow.pop %v1535
        %v1537 = vmul.f32 %v1527, 1.442695
        %v1538 = vpow.pop %v1537
        %v1539 = vmul.f32 %v1528, 1.442695
        %v1540 = vpow.pop %v1539
        %v1541 = vmul.f32 %v1529, 1.442695
        %v1542 = vpow.pop %v1541
        %v1543 = vmul.f32 %v1530, 1.442695
        %v1544 = vpow.pop %v1543
        %v1545 = vmul.f32 %v1531, 1.442695
        %v1546 = vpow.pop %v1545
        %v1547 = vmul.f32 %v1532, 1.442695
        %v1548 = vpow.pop %v1547
        %v1549 = vadd.f32 %v1534, %v1536
        %1550 = vadd.xlane.f32.xlu0 %v1549
        %v1551 = vpop.xlane.xlu0 %1550
        %v1552 = vadd.f32 %v1538, %v1540
        %1553 = vadd.xlane.f32.xlu0 %v1552
        %v1554 = vpop.xlane.xlu0 %1553
        %v1555 = vadd.f32 %v1542, %v1544
        %1556 = vadd.xlane.f32.xlu0 %v1555
        %v1557 = vpop.xlane.xlu0 %1556
        %v1558 = vadd.f32 %v1546, %v1548
        %1559 = vadd.xlane.f32.xlu0 %v1558
        %v1560 = vpop.xlane.xlu0 %1559
        %v1561 = vrcp.pop %v1551
        %v1562 = vmul.f32 %v1534, %v1561
        %v1563 = vmul.f32 %v1536, %v1561
        %v1564 = vrcp.pop %v1554
        %v1565 = vmul.f32 %v1538, %v1564
        %v1566 = vmul.f32 %v1540, %v1564
        %v1567 = vrcp.pop %v1557
        %v1568 = vmul.f32 %v1542, %v1567
        %v1569 = vmul.f32 %v1544, %v1567
        %v1570 = vrcp.pop %v1560
        %v1571 = vmul.f32 %v1546, %v1570
        %v1572 = vmul.f32 %v1548, %v1570
        %1573 = vmatprep.subr.mxu0 0.0
        %1574 = vmatpush1.xpose.msra.mxu0 0.0
        %1575 = vmatprep.subr.mxu0 0.0
        %1576 = vmatpush1.xpose.msra.mxu0 0.0
        %1577 = vmatprep.subr.mxu0 0.0
        %1578 = vmatpush1.xpose.msra.mxu0 0.0
        %1579 = vmatprep.subr.mxu0 0.0
        %1580 = vmatpush1.xpose.msra.mxu0 0.0
        %1581 = vmatprep.subr.mxu0 0.0
        %1582 = vmatpush1.xpose.msra.mxu0 0.0
        %1583 = vmatprep.subr.mxu0 0.0
        %1584 = vmatpush1.xpose.msra.mxu0 0.0
        %1585 = vmatprep.subr.mxu0 0.0
        %1586 = vmatpush1.xpose.msra.mxu0 0.0
        %1587 = vmatprep.subr.mxu0 0.0
        %1588 = vmatpush1.xpose.msra.mxu0 0.0
        %1589 = vmatprep.subr.mxu0 0.0
        %1590 = vmatpush1.xpose.msra.mxu0 0.0
        %1591 = vmatprep.subr.mxu0 0.0
        %1592 = vmatpush1.xpose.msra.mxu0 0.0
        %1593 = vmatprep.subr.mxu0 0.0
        %1594 = vmatpush1.xpose.msra.mxu0 0.0
        %1595 = vmatprep.subr.mxu0 0.0
        %1596 = vmatpush1.xpose.msra.mxu0 0.0
        %1597 = vmatprep.subr.mxu0 %v1572
        %1598 = vmatpush1.xpose.msra.mxu0 %v1571
        %1599 = vmatprep.subr.mxu0 %v1569
        %1600 = vmatpush1.xpose.msra.mxu0 %v1568
        %1601 = vmatprep.subr.mxu0 %v1566
        %1602 = vmatpush1.xpose.msra.mxu0 %v1565
        %1603 = vmatprep.subr.mxu0 %v1563
        %1604 = vmatpush1.xpose.msra.mxu0 %v1562
        %1605 = vmatprep.subr.mxu0 0.0
        %1606 = vmatpush2.xpose.msra.mxu0 0.0
        %1607 = vmatprep.subr.mxu0 0.0
        %1608 = vmatpush2.xpose.msra.mxu0 0.0
        %1609 = vmatprep.subr.mxu0 0.0
        %1610 = vmatpush2.xpose.msra.mxu0 0.0
        %1611 = vmatprep.subr.mxu0 0.0
        %1612 = vmatpush2.xpose.msra.mxu0 0.0
        %1613 = vmatprep.subr.mxu0 0.0
        %1614 = vmatpush2.xpose.msra.mxu0 0.0
        %1615 = vmatprep.subr.mxu0 0.0
        %1616 = vmatpush2.xpose.msra.mxu0 0.0
        %1617 = vmatprep.subr.mxu0 0.0
        %1618 = vmatpush2.xpose.msra.mxu0 0.0
        %1619 = vmatprep.subr.mxu0 0.0
        %1620 = vmatpush2.xpose.msra.mxu0 0.0
        %1621 = vmatprep.subr.mxu0 0.0
        %1622 = vmatpush2.xpose.msra.mxu0 0.0
        %1623 = vmatprep.subr.mxu0 0.0
        %1624 = vmatpush2.xpose.msra.mxu0 0.0
        %1625 = vmatprep.subr.mxu0 0.0
        %1626 = vmatpush2.xpose.msra.mxu0 0.0
        %1627 = vmatprep.subr.mxu0 0.0
        %1628 = vmatpush2.xpose.msra.mxu0 0.0
        %1629 = vmatprep.subr.mxu0 0.0
        %1630 = vmatpush2.xpose.msra.mxu0 0.0
        %1631 = vmatprep.subr.mxu0 0.0
        %1632 = vmatpush2.xpose.msra.mxu0 0.0
        %1633 = vmatprep.subr.mxu0 0.0
        %1634 = vmatpush2.xpose.msra.mxu0 0.0
        %1635 = vmatprep.subr.mxu0 0.0
        %1636 = vmatpush2.xpose.msra.mxu0 0.0
        %1637 = vmatprep.mubr.f32.mxu0 %v760
        %1638 = vmatmul.mubr.f32.gmra.mxu0 %v758
        %v1639 = vpop.f32.mrf.mxu0
        %v1640 = vadd.f32 0.0, %v1639
        %v1641 = vpop.f32.mrf.mxu0
        %1642 = vmatprep.mubr.f32.mxu0 %v766
        %1643 = vmatmul.mubr.f32.gmra.mxu0 %v764
        %v1644 = vpop.f32.mrf.mxu0
        %v1645 = vadd.f32 0.0, %v1644
        %v1646 = vpop.f32.mrf.mxu0
        %1647 = vmatprep.mubr.f32.mxu0 %v772
        %1648 = vmatmul.mubr.f32.gmra.mxu0 %v770
        %v1649 = vpop.f32.mrf.mxu0
        %v1650 = vadd.f32 0.0, %v1649
        %v1651 = vpop.f32.mrf.mxu0
        %1652 = vmatprep.mubr.f32.mxu0 %v778
        %1653 = vmatmul.mubr.f32.gmra.mxu0 %v776
        %v1654 = vpop.f32.mrf.mxu0
        %v1655 = vadd.f32 0.0, %v1654
        %v1656 = vpop.f32.mrf.mxu0
        %1657 = vdwg.mxu0
        %v1659 = vsel %vm1021, %v1640, 0
        %v1662 = vsel %vm1021, %v1645, 0
        %v1665 = vsel %vm1021, %v1650, 0
        %v1668 = vsel %vm1021, %v1655, 0
        %1670 = vmatprep.subr.mxu0 0.0
        %1671 = vmatpush1.msra.mxu0 0.0
        %1672 = vmatprep.subr.mxu0 0.0
        %1673 = vmatpush1.msra.mxu0 0.0
        %1674 = vmatprep.subr.mxu0 0.0
        %1675 = vmatpush1.msra.mxu0 0.0
        %1676 = vmatprep.subr.mxu0 0.0
        %1677 = vmatpush1.msra.mxu0 0.0
        %1678 = vmatprep.subr.mxu0 0.0
        %1679 = vmatpush1.msra.mxu0 0.0
        %1680 = vmatprep.subr.mxu0 0.0
        %1681 = vmatpush1.msra.mxu0 0.0
        %1682 = vmatprep.subr.mxu0 0.0
        %1683 = vmatpush1.msra.mxu0 0.0
        %1684 = vmatprep.subr.mxu0 0.0
        %1685 = vmatpush1.msra.mxu0 0.0
        %1686 = vmatprep.subr.mxu0 0.0
        %1687 = vmatpush1.msra.mxu0 0.0
        %1688 = vmatprep.subr.mxu0 0.0
        %1689 = vmatpush1.msra.mxu0 0.0
        %1690 = vmatprep.subr.mxu0 0.0
        %1691 = vmatpush1.msra.mxu0 0.0
        %1692 = vmatprep.subr.mxu0 0.0
        %1693 = vmatpush1.msra.mxu0 0.0
        %1694 = vmatprep.subr.mxu0 %v1512
        %1695 = vmatpush1.msra.mxu0 %v1511
        %1696 = vmatprep.subr.mxu0 %v1510
        %1697 = vmatpush1.msra.mxu0 %v1509
        %1698 = vmatprep.subr.mxu0 %v1508
        %1699 = vmatpush1.msra.mxu0 %v1507
        %1700 = vmatprep.subr.mxu0 %v1506
        %1701 = vmatpush1.msra.mxu0 %v1505
        %1702 = vmatprep.subr.mxu0 0.0
        %1703 = vmatpush2.msra.mxu0 0.0
        %1704 = vmatprep.subr.mxu0 0.0
        %1705 = vmatpush2.msra.mxu0 0.0
        %1706 = vmatprep.subr.mxu0 0.0
        %1707 = vmatpush2.msra.mxu0 0.0
        %1708 = vmatprep.subr.mxu0 0.0
        %1709 = vmatpush2.msra.mxu0 0.0
        %1710 = vmatprep.subr.mxu0 0.0
        %1711 = vmatpush2.msra.mxu0 0.0
        %1712 = vmatprep.subr.mxu0 0.0
        %1713 = vmatpush2.msra.mxu0 0.0
        %1714 = vmatprep.subr.mxu0 0.0
        %1715 = vmatpush2.msra.mxu0 0.0
        %1716 = vmatprep.subr.mxu0 0.0
        %1717 = vmatpush2.msra.mxu0 0.0
        %1718 = vmatprep.subr.mxu0 0.0
        %1719 = vmatpush2.msra.mxu0 0.0
        %1720 = vmatprep.subr.mxu0 0.0
        %1721 = vmatpush2.msra.mxu0 0.0
        %1722 = vmatprep.subr.mxu0 0.0
        %1723 = vmatpush2.msra.mxu0 0.0
        %1724 = vmatprep.subr.mxu0 0.0
        %1725 = vmatpush2.msra.mxu0 0.0
        %1726 = vmatprep.subr.mxu0 0.0
        %1727 = vmatpush2.msra.mxu0 0.0
        %1728 = vmatprep.subr.mxu0 0.0
        %1729 = vmatpush2.msra.mxu0 0.0
        %1730 = vmatprep.subr.mxu0 0.0
        %1731 = vmatpush2.msra.mxu0 0.0
        %1732 = vmatprep.subr.mxu0 0.0
        %1733 = vmatpush2.msra.mxu0 0.0
        %1734 = vmatprep.mubr.f32.mxu0 0.0
        %1735 = vmatmul.mubr.f32.gmra.mxu0 %v1659
        %v1736 = vpop.f32.mrf.mxu0
        %v1737 = vadd.f32 0.0, %v1736
        %v1738 = vpop.f32.mrf.mxu0
        %v1739 = vadd.f32 0.0, %v1738
        %1740 = vmatprep.mubr.f32.mxu0 0.0
        %1741 = vmatmul.mubr.f32.gmra.mxu0 %v1662
        %v1742 = vpop.f32.mrf.mxu0
        %v1743 = vadd.f32 0.0, %v1742
        %v1744 = vpop.f32.mrf.mxu0
        %v1745 = vadd.f32 0.0, %v1744
        %1746 = vmatprep.mubr.f32.mxu0 0.0
        %1747 = vmatmul.mubr.f32.gmra.mxu0 %v1665
        %v1748 = vpop.f32.mrf.mxu0
        %v1749 = vadd.f32 0.0, %v1748
        %v1750 = vpop.f32.mrf.mxu0
        %v1751 = vadd.f32 0.0, %v1750
        %1752 = vmatprep.mubr.f32.mxu0 0.0
        %1753 = vmatmul.mubr.f32.gmra.mxu0 %v1668
        %v1754 = vpop.f32.mrf.mxu0
        %v1755 = vadd.f32 0.0, %v1754
        %v1756 = vpop.f32.mrf.mxu0
        %v1757 = vadd.f32 0.0, %v1756
        %1758 = vdwg.mxu0
        %v1759 = vmax.f32 %v590, %v602
        %v1760 = vmax.f32 %v596, %v608
        %v1761 = vmax.f32 %v1759, %v1760
        %v1762 = vrot.slane %v1761, 4
        %v1763 = vmax.f32 %v1761, %v1762
        %v1764 = vrot.slane %v1763, 2
        %v1765 = vmax.f32 %v1763, %v1764
        %v1766 = vrot.slane %v1765, 1
        %v1767 = vmax.f32 %v1765, %v1766
        %v1768 = vmax.f32 %v592, %v604
        %v1769 = vmax.f32 %v598, %v610
        %v1770 = vmax.f32 %v1768, %v1769
        %v1771 = vrot.slane %v1770, 4
        %v1772 = vmax.f32 %v1770, %v1771
        %v1773 = vrot.slane %v1772, 2
        %v1774 = vmax.f32 %v1772, %v1773
        %v1775 = vrot.slane %v1774, 1
        %v1776 = vmax.f32 %v1774, %v1775
        %v1777 = vsub.f32 %v590, %v1767
        %v1778 = vsub.f32 %v592, %v1776
        %v1779 = vsub.f32 %v596, %v1767
        %v1780 = vsub.f32 %v598, %v1776
        %v1781 = vsub.f32 %v602, %v1767
        %v1782 = vsub.f32 %v604, %v1776
        %v1783 = vsub.f32 %v608, %v1767
        %v1784 = vsub.f32 %v610, %v1776
        %v1785 = vmul.f32 %v1777, 1.442695
        %v1786 = vpow.pop %v1785
        %v1787 = vmul.f32 %v1778, 1.442695
        %v1788 = vpow.pop %v1787
        %v1789 = vmul.f32 %v1779, 1.442695
        %v1790 = vpow.pop %v1789
        %v1791 = vmul.f32 %v1780, 1.442695
        %v1792 = vpow.pop %v1791
        %v1793 = vmul.f32 %v1781, 1.442695
        %v1794 = vpow.pop %v1793
        %v1795 = vmul.f32 %v1782, 1.442695
        %v1796 = vpow.pop %v1795
        %v1797 = vmul.f32 %v1783, 1.442695
        %v1798 = vpow.pop %v1797
        %v1799 = vmul.f32 %v1784, 1.442695
        %v1800 = vpow.pop %v1799
        %v1801 = vadd.f32 %v1786, %v1790
        %v1802 = vadd.f32 %v1801, %v1794
        %v1803 = vadd.f32 %v1802, %v1798
        %v1804 = vrot.slane %v1803, 4
        %v1805 = vadd.f32 %v1803, %v1804
        %v1806 = vrot.slane %v1805, 2
        %v1807 = vadd.f32 %v1805, %v1806
        %v1808 = vrot.slane %v1807, 1
        %v1809 = vadd.f32 %v1807, %v1808
        %v1810 = vadd.f32 %v1788, %v1792
        %v1811 = vadd.f32 %v1810, %v1796
        %v1812 = vadd.f32 %v1811, %v1800
        %v1813 = vrot.slane %v1812, 4
        %v1814 = vadd.f32 %v1812, %v1813
        %v1815 = vrot.slane %v1814, 2
        %v1816 = vadd.f32 %v1814, %v1815
        %v1817 = vrot.slane %v1816, 1
        %v1818 = vadd.f32 %v1816, %v1817
        %v1819 = vrcp.pop %v1809
        %v1820 = vmul.f32 0.17677669, %v1819
        %v1821 = vrcp.pop %v1818
        %v1822 = vmul.f32 0.17677669, %v1821
        %v1823 = vmul.f32 %v1786, %v1820
        %v1824 = vmul.f32 %v1788, %v1822
        %v1825 = vmul.f32 %v1790, %v1820
        %v1826 = vmul.f32 %v1792, %v1822
        %v1827 = vmul.f32 %v1794, %v1820
        %v1828 = vmul.f32 %v1796, %v1822
        %v1829 = vmul.f32 %v1798, %v1820
        %v1830 = vmul.f32 %v1800, %v1822
        %v1831 = vmax.f32 %v686, %v688
        %1832 = vmax.xlane.f32.xlu0 %v1831
        %v1833 = vpop.xlane.xlu0 %1832
        %v1834 = vmax.f32 %v692, %v694
        %1835 = vmax.xlane.f32.xlu0 %v1834
        %v1836 = vpop.xlane.xlu0 %1835
        %v1837 = vmax.f32 %v698, %v700
        %1838 = vmax.xlane.f32.xlu0 %v1837
        %v1839 = vpop.xlane.xlu0 %1838
        %v1840 = vmax.f32 %v704, %v706
        %1841 = vmax.xlane.f32.xlu0 %v1840
        %v1842 = vpop.xlane.xlu0 %1841
        %v1843 = vsub.f32 %v686, %v1833
        %v1844 = vsub.f32 %v688, %v1833
        %v1845 = vsub.f32 %v692, %v1836
        %v1846 = vsub.f32 %v694, %v1836
        %v1847 = vsub.f32 %v698, %v1839
        %v1848 = vsub.f32 %v700, %v1839
        %v1849 = vsub.f32 %v704, %v1842
        %v1850 = vsub.f32 %v706, %v1842
        %v1851 = vmul.f32 %v1843, 1.442695
        %v1852 = vpow.pop %v1851
        %v1853 = vmul.f32 %v1844, 1.442695
        %v1854 = vpow.pop %v1853
        %v1855 = vmul.f32 %v1845, 1.442695
        %v1856 = vpow.pop %v1855
        %v1857 = vmul.f32 %v1846, 1.442695
        %v1858 = vpow.pop %v1857
        %v1859 = vmul.f32 %v1847, 1.442695
        %v1860 = vpow.pop %v1859
        %v1861 = vmul.f32 %v1848, 1.442695
        %v1862 = vpow.pop %v1861
        %v1863 = vmul.f32 %v1849, 1.442695
        %v1864 = vpow.pop %v1863
        %v1865 = vmul.f32 %v1850, 1.442695
        %v1866 = vpow.pop %v1865
        %v1867 = vadd.f32 %v1852, %v1854
        %1868 = vadd.xlane.f32.xlu0 %v1867
        %v1869 = vpop.xlane.xlu0 %1868
        %v1870 = vadd.f32 %v1856, %v1858
        %1871 = vadd.xlane.f32.xlu0 %v1870
        %v1872 = vpop.xlane.xlu0 %1871
        %v1873 = vadd.f32 %v1860, %v1862
        %1874 = vadd.xlane.f32.xlu0 %v1873
        %v1875 = vpop.xlane.xlu0 %1874
        %v1876 = vadd.f32 %v1864, %v1866
        %1877 = vadd.xlane.f32.xlu0 %v1876
        %v1878 = vpop.xlane.xlu0 %1877
        %v1879 = vrcp.pop %v1869
        %v1880 = vmul.f32 %v1852, %v1879
        %v1881 = vmul.f32 %v1854, %v1879
        %v1882 = vrcp.pop %v1872
        %v1883 = vmul.f32 %v1856, %v1882
        %v1884 = vmul.f32 %v1858, %v1882
        %v1885 = vrcp.pop %v1875
        %v1886 = vmul.f32 %v1860, %v1885
        %v1887 = vmul.f32 %v1862, %v1885
        %v1888 = vrcp.pop %v1878
        %v1889 = vmul.f32 %v1864, %v1888
        %v1890 = vmul.f32 %v1866, %v1888
        %1891 = vmatprep.subr.mxu0 0.0
        %1892 = vmatpush1.xpose.msra.mxu0 0.0
        %1893 = vmatprep.subr.mxu0 0.0
        %1894 = vmatpush1.xpose.msra.mxu0 0.0
        %1895 = vmatprep.subr.mxu0 0.0
        %1896 = vmatpush1.xpose.msra.mxu0 0.0
        %1897 = vmatprep.subr.mxu0 0.0
        %1898 = vmatpush1.xpose.msra.mxu0 0.0
        %1899 = vmatprep.subr.mxu0 0.0
        %1900 = vmatpush1.xpose.msra.mxu0 0.0
        %1901 = vmatprep.subr.mxu0 0.0
        %1902 = vmatpush1.xpose.msra.mxu0 0.0
        %1903 = vmatprep.subr.mxu0 0.0
        %1904 = vmatpush1.xpose.msra.mxu0 0.0
        %1905 = vmatprep.subr.mxu0 0.0
        %1906 = vmatpush1.xpose.msra.mxu0 0.0
        %1907 = vmatprep.subr.mxu0 0.0
        %1908 = vmatpush1.xpose.msra.mxu0 0.0
        %1909 = vmatprep.subr.mxu0 0.0
        %1910 = vmatpush1.xpose.msra.mxu0 0.0
        %1911 = vmatprep.subr.mxu0 0.0
        %1912 = vmatpush1.xpose.msra.mxu0 0.0
        %1913 = vmatprep.subr.mxu0 0.0
        %1914 = vmatpush1.xpose.msra.mxu0 0.0
        %1915 = vmatprep.subr.mxu0 %v1890
        %1916 = vmatpush1.xpose.msra.mxu0 %v1889
        %1917 = vmatprep.subr.mxu0 %v1887
        %1918 = vmatpush1.xpose.msra.mxu0 %v1886
        %1919 = vmatprep.subr.mxu0 %v1884
        %1920 = vmatpush1.xpose.msra.mxu0 %v1883
        %1921 = vmatprep.subr.mxu0 %v1881
        %1922 = vmatpush1.xpose.msra.mxu0 %v1880
        %1923 = vmatprep.subr.mxu0 0.0
        %1924 = vmatpush2.xpose.msra.mxu0 0.0
        %1925 = vmatprep.subr.mxu0 0.0
        %1926 = vmatpush2.xpose.msra.mxu0 0.0
        %1927 = vmatprep.subr.mxu0 0.0
        %1928 = vmatpush2.xpose.msra.mxu0 0.0
        %1929 = vmatprep.subr.mxu0 0.0
        %1930 = vmatpush2.xpose.msra.mxu0 0.0
        %1931 = vmatprep.subr.mxu0 0.0
        %1932 = vmatpush2.xpose.msra.mxu0 0.0
        %1933 = vmatprep.subr.mxu0 0.0
        %1934 = vmatpush2.xpose.msra.mxu0 0.0
        %1935 = vmatprep.subr.mxu0 0.0
        %1936 = vmatpush2.xpose.msra.mxu0 0.0
        %1937 = vmatprep.subr.mxu0 0.0
        %1938 = vmatpush2.xpose.msra.mxu0 0.0
        %1939 = vmatprep.subr.mxu0 0.0
        %1940 = vmatpush2.xpose.msra.mxu0 0.0
        %1941 = vmatprep.subr.mxu0 0.0
        %1942 = vmatpush2.xpose.msra.mxu0 0.0
        %1943 = vmatprep.subr.mxu0 0.0
        %1944 = vmatpush2.xpose.msra.mxu0 0.0
        %1945 = vmatprep.subr.mxu0 0.0
        %1946 = vmatpush2.xpose.msra.mxu0 0.0
        %1947 = vmatprep.subr.mxu0 0.0
        %1948 = vmatpush2.xpose.msra.mxu0 0.0
        %1949 = vmatprep.subr.mxu0 0.0
        %1950 = vmatpush2.xpose.msra.mxu0 0.0
        %1951 = vmatprep.subr.mxu0 0.0
        %1952 = vmatpush2.xpose.msra.mxu0 0.0
        %1953 = vmatprep.subr.mxu0 0.0
        %1954 = vmatpush2.xpose.msra.mxu0 0.0
        %1955 = vmatprep.mubr.f32.mxu0 %v784
        %1956 = vmatmul.mubr.f32.gmra.mxu0 %v782
        %v1957 = vpop.f32.mrf.mxu0
        %v1958 = vadd.f32 0.0, %v1957
        %v1959 = vpop.f32.mrf.mxu0
        %1960 = vmatprep.mubr.f32.mxu0 %v790
        %1961 = vmatmul.mubr.f32.gmra.mxu0 %v788
        %v1962 = vpop.f32.mrf.mxu0
        %v1963 = vadd.f32 0.0, %v1962
        %v1964 = vpop.f32.mrf.mxu0
        %1965 = vmatprep.mubr.f32.mxu0 %v796
        %1966 = vmatmul.mubr.f32.gmra.mxu0 %v794
        %v1967 = vpop.f32.mrf.mxu0
        %v1968 = vadd.f32 0.0, %v1967
        %v1969 = vpop.f32.mrf.mxu0
        %1970 = vmatprep.mubr.f32.mxu0 %v802
        %1971 = vmatmul.mubr.f32.gmra.mxu0 %v800
        %v1972 = vpop.f32.mrf.mxu0
        %v1973 = vadd.f32 0.0, %v1972
        %v1974 = vpop.f32.mrf.mxu0
        %1975 = vdwg.mxu0
        %v1977 = vsel %vm1021, %v1958, 0
        %v1980 = vsel %vm1021, %v1963, 0
        %v1983 = vsel %vm1021, %v1968, 0
        %v1986 = vsel %vm1021, %v1973, 0
        %1988 = vmatprep.subr.mxu0 0.0
        %1989 = vmatpush1.msra.mxu0 0.0
        %1990 = vmatprep.subr.mxu0 0.0
        %1991 = vmatpush1.msra.mxu0 0.0
        %1992 = vmatprep.subr.mxu0 0.0
        %1993 = vmatpush1.msra.mxu0 0.0
        %1994 = vmatprep.subr.mxu0 0.0
        %1995 = vmatpush1.msra.mxu0 0.0
        %1996 = vmatprep.subr.mxu0 0.0
        %1997 = vmatpush1.msra.mxu0 0.0
        %1998 = vmatprep.subr.mxu0 0.0
        %1999 = vmatpush1.msra.mxu0 0.0
        %2000 = vmatprep.subr.mxu0 0.0
        %2001 = vmatpush1.msra.mxu0 0.0
        %2002 = vmatprep.subr.mxu0 0.0
        %2003 = vmatpush1.msra.mxu0 0.0
        %2004 = vmatprep.subr.mxu0 0.0
        %2005 = vmatpush1.msra.mxu0 0.0
        %2006 = vmatprep.subr.mxu0 0.0
        %2007 = vmatpush1.msra.mxu0 0.0
        %2008 = vmatprep.subr.mxu0 0.0
        %2009 = vmatpush1.msra.mxu0 0.0
        %2010 = vmatprep.subr.mxu0 0.0
        %2011 = vmatpush1.msra.mxu0 0.0
        %2012 = vmatprep.subr.mxu0 %v1830
        %2013 = vmatpush1.msra.mxu0 %v1829
        %2014 = vmatprep.subr.mxu0 %v1828
        %2015 = vmatpush1.msra.mxu0 %v1827
        %2016 = vmatprep.subr.mxu0 %v1826
        %2017 = vmatpush1.msra.mxu0 %v1825
        %2018 = vmatprep.subr.mxu0 %v1824
        %2019 = vmatpush1.msra.mxu0 %v1823
        %2020 = vmatprep.subr.mxu0 0.0
        %2021 = vmatpush2.msra.mxu0 0.0
        %2022 = vmatprep.subr.mxu0 0.0
        %2023 = vmatpush2.msra.mxu0 0.0
        %2024 = vmatprep.subr.mxu0 0.0
        %2025 = vmatpush2.msra.mxu0 0.0
        %2026 = vmatprep.subr.mxu0 0.0
        %2027 = vmatpush2.msra.mxu0 0.0
        %2028 = vmatprep.subr.mxu0 0.0
        %2029 = vmatpush2.msra.mxu0 0.0
        %2030 = vmatprep.subr.mxu0 0.0
        %2031 = vmatpush2.msra.mxu0 0.0
        %2032 = vmatprep.subr.mxu0 0.0
        %2033 = vmatpush2.msra.mxu0 0.0
        %2034 = vmatprep.subr.mxu0 0.0
        %2035 = vmatpush2.msra.mxu0 0.0
        %2036 = vmatprep.subr.mxu0 0.0
        %2037 = vmatpush2.msra.mxu0 0.0
        %2038 = vmatprep.subr.mxu0 0.0
        %2039 = vmatpush2.msra.mxu0 0.0
        %2040 = vmatprep.subr.mxu0 0.0
        %2041 = vmatpush2.msra.mxu0 0.0
        %2042 = vmatprep.subr.mxu0 0.0
        %2043 = vmatpush2.msra.mxu0 0.0
        %2044 = vmatprep.subr.mxu0 0.0
        %2045 = vmatpush2.msra.mxu0 0.0
        %2046 = vmatprep.subr.mxu0 0.0
        %2047 = vmatpush2.msra.mxu0 0.0
        %2048 = vmatprep.subr.mxu0 0.0
        %2049 = vmatpush2.msra.mxu0 0.0
        %2050 = vmatprep.subr.mxu0 0.0
        %2051 = vmatpush2.msra.mxu0 0.0
        %2052 = vmatprep.mubr.f32.mxu0 0.0
        %2053 = vmatmul.mubr.f32.gmra.mxu0 %v1977
        %v2054 = vpop.f32.mrf.mxu0
        %v2055 = vadd.f32 0.0, %v2054
        %v2056 = vpop.f32.mrf.mxu0
        %v2057 = vadd.f32 0.0, %v2056
        %2058 = vmatprep.mubr.f32.mxu0 0.0
        %2059 = vmatmul.mubr.f32.gmra.mxu0 %v1980
        %v2060 = vpop.f32.mrf.mxu0
        %v2061 = vadd.f32 0.0, %v2060
        %v2062 = vpop.f32.mrf.mxu0
        %v2063 = vadd.f32 0.0, %v2062
        %2064 = vmatprep.mubr.f32.mxu0 0.0
        %2065 = vmatmul.mubr.f32.gmra.mxu0 %v1983
        %v2066 = vpop.f32.mrf.mxu0
        %v2067 = vadd.f32 0.0, %v2066
        %v2068 = vpop.f32.mrf.mxu0
        %v2069 = vadd.f32 0.0, %v2068
        %2070 = vmatprep.mubr.f32.mxu0 0.0
        %2071 = vmatmul.mubr.f32.gmra.mxu0 %v1986
        %v2072 = vpop.f32.mrf.mxu0
        %v2073 = vadd.f32 0.0, %v2072
        %v2074 = vpop.f32.mrf.mxu0
        %v2075 = vadd.f32 0.0, %v2074
        %2076 = vdwg.mxu0
        %v2077 = vld [vmem:[%s2] sm:$0xf]
        %v2078 = vld [vmem:[%s3] sm:$0xf]
        %2080 = vset.pattern.permute.xlu0 0
        %2081 = vperm.xlu0 %2080, %v2078
        %v2082 = vpop.permute.xlu0 %2081
        %2084 = vmatprep.subr.mxu0 %v2075
        %2085 = vmatpush1.msra.mxu0 %v2073
        %2086 = vmatprep.subr.mxu0 %v2069
        %2087 = vmatpush1.msra.mxu0 %v2067
        %2088 = vmatprep.subr.mxu0 %v2063
        %2089 = vmatpush1.msra.mxu0 %v2061
        %2090 = vmatprep.subr.mxu0 %v2057
        %2091 = vmatpush1.msra.mxu0 %v2055
        %2092 = vmatprep.subr.mxu0 %v1757
        %2093 = vmatpush1.msra.mxu0 %v1755
        %2094 = vmatprep.subr.mxu0 %v1751
        %2095 = vmatpush1.msra.mxu0 %v1749
        %2096 = vmatprep.subr.mxu0 %v1745
        %2097 = vmatpush1.msra.mxu0 %v1743
        %2098 = vmatprep.subr.mxu0 %v1739
        %2099 = vmatpush1.msra.mxu0 %v1737
        %2100 = vmatprep.subr.mxu0 %v1439
        %2101 = vmatpush1.msra.mxu0 %v1437
        %2102 = vmatprep.subr.mxu0 %v1433
        %2103 = vmatpush1.msra.mxu0 %v1431
        %2104 = vmatprep.subr.mxu0 %v1427
        %2105 = vmatpush1.msra.mxu0 %v1425
        %2106 = vmatprep.subr.mxu0 %v1421
        %2107 = vmatpush1.msra.mxu0 %v1419
        %2108 = vmatprep.subr.mxu0 %v1121
        %2109 = vmatpush1.msra.mxu0 %v1119
        %2110 = vmatprep.subr.mxu0 %v1115
        %2111 = vmatpush1.msra.mxu0 %v1113
        %2112 = vmatprep.subr.mxu0 %v1109
        %2113 = vmatpush1.msra.mxu0 %v1107
        %2114 = vmatprep.subr.mxu0 %v1103
        %2115 = vmatpush1.msra.mxu0 %v1101
        %2116 = vmatprep.subr.mxu0 0.0
        %2117 = vmatpush2.msra.mxu0 0.0
        %2118 = vmatprep.subr.mxu0 0.0
        %2119 = vmatpush2.msra.mxu0 0.0
        %2120 = vmatprep.subr.mxu0 0.0
        %2121 = vmatpush2.msra.mxu0 0.0
        %2122 = vmatprep.subr.mxu0 0.0
        %2123 = vmatpush2.msra.mxu0 0.0
        %2124 = vmatprep.subr.mxu0 0.0
        %2125 = vmatpush2.msra.mxu0 0.0
        %2126 = vmatprep.subr.mxu0 0.0
        %2127 = vmatpush2.msra.mxu0 0.0
        %2128 = vmatprep.subr.mxu0 0.0
        %2129 = vmatpush2.msra.mxu0 0.0
        %2130 = vmatprep.subr.mxu0 0.0
        %2131 = vmatpush2.msra.mxu0 0.0
        %2132 = vmatprep.subr.mxu0 0.0
        %2133 = vmatpush2.msra.mxu0 0.0
        %2134 = vmatprep.subr.mxu0 0.0
        %2135 = vmatpush2.msra.mxu0 0.0
        %2136 = vmatprep.subr.mxu0 0.0
        %2137 = vmatpush2.msra.mxu0 0.0
        %2138 = vmatprep.subr.mxu0 0.0
        %2139 = vmatpush2.msra.mxu0 0.0
        %2140 = vmatprep.subr.mxu0 0.0
        %2141 = vmatpush2.msra.mxu0 0.0
        %2142 = vmatprep.subr.mxu0 0.0
        %2143 = vmatpush2.msra.mxu0 0.0
        %2144 = vmatprep.subr.mxu0 0.0
        %2145 = vmatpush2.msra.mxu0 0.0
        %2146 = vmatprep.subr.mxu0 0.0
        %2147 = vmatpush2.msra.mxu0 0.0
        %2148 = vmatprep.mubr.f32.mxu0 0.0
        %2149 = vmatmul.mubr.f32.gmra.mxu0 %v2077
        %v2150 = vpop.f32.mrf.mxu0
        %v2151 = vadd.f32 %v2082, %v2150
        %v2152 = vpop.f32.mrf.mxu0
        %v2153 = vadd.f32 %v2082, %v2152
        %2154 = vdwg.mxu0
        %v2155 = vsel %vm446, %v2151, 0.0
        %v2156 = vsel %vm446, %v2153, 0.0
        %v2157 = vadd.f32 %v2155, %v2156
        %2158 = vadd.xlane.f32.xlu0 %v2157
        %v2159 = vpop.xlane.xlu0 %2158
        %v2160 = vrot.slane %v2159, 4
        %v2161 = vadd.f32 %v2159, %v2160
        %v2162 = vrot.slane %v2161, 2
        %v2163 = vadd.f32 %v2161, %v2162
        %v2164 = vrot.slane %v2163, 1
        %v2165 = vadd.f32 %v2163, %v2164
        %s2166 = vtos %v2165
        %v2167 = vstv %s2166
        %v2168 = vrcp.pop 1024.0
        %v2169 = vmul.f32 %v2167, %v2168
        %v2170 = vsub.f32 %v2151, %v2169
        %v2171 = vsub.f32 %v2153, %v2169
        %v2172 = vmul.f32 %v2170, %v2170
        %v2173 = vmul.f32 %v2171, %v2171
        %v2174 = vsel %vm446, %v2172, 0.0
        %v2175 = vsel %vm446, %v2173, 0.0
        %v2176 = vadd.f32 %v2174, %v2175
        %2177 = vadd.xlane.f32.xlu0 %v2176
        %v2178 = vpop.xlane.xlu0 %2177
        %v2179 = vrot.slane %v2178, 4
        %v2180 = vadd.f32 %v2178, %v2179
        %v2181 = vrot.slane %v2180, 2
        %v2182 = vadd.f32 %v2180, %v2181
        %v2183 = vrot.slane %v2182, 1
        %v2184 = vadd.f32 %v2182, %v2183
        %s2185 = vtos %v2184
        %v2186 = vstv %s2185
        %v2187 = vmul.f32 %v2186, %v2168
        %v2188 = vadd.f32 %v2187, 1e-05
        %v2189 = vrsqrt.pop %v2188
        %v2190 = vld [vmem:[%s4] sm:$0xf]
        %v2191 = vmul.f32 %v2190, %v2189
        %2193 = vset.pattern.permute.xlu0 0
        %2194 = vperm.xlu0 %2193, %v2191
        %v2195 = vpop.permute.xlu0 %2194
        %v2197 = vmul.f32 %v2170, %v2195
        %v2198 = vmul.f32 %v2171, %v2195
        %v2199 = vld [vmem:[%s5] sm:$0xf]
        %2201 = vset.pattern.permute.xlu0 0
        %2202 = vperm.xlu0 %2201, %v2199
        %v2203 = vpop.permute.xlu0 %2202
        %v2205 = vadd.f32 %v2197, %v2203
        %v2206 = vadd.f32 %v2198, %v2203
        %v2209 = vcombine.low %v2205, %v2206
        %2211 = vst [vmem:[%s244] sm:$0xff] %v2209
        %s2212 = sand.u32 %s159, 1
        %s2213 = scalar_lea.sflag [#allocation3], %s2212
        %s2214 = sand.u32 %s159, 1
        %s2215 = smul.addr %s2214, 8
        %s2216 = scalar_lea.vmem [#allocation2], %s2215
        // Predicated region
        $region45: #{tpu_custom_call.1} parent=43 // pred_check
          %p2217 = pneg %p169
        $region46: #{tpu_custom_call.1} parent=43 // pred_check_branch
          %2219 = sbr.rel (%p2217) target = $region48
        $region47: #{tpu_custom_call.1} parent=43 // pred_region
          %s2221 = ssub.s32 128, 128
          %2222 = vsyncadd %s2213, %s2221
          %s2223 = smul.addr %s20, 2
          %s2224 = smul.addr %s2223, 64
          %s2225 = scalar_lea.hbm %s6, %s2224
          %s2227 = sshll.u32 %s2216, 4
          %s2228 = int_to_ptr.vmem [resolvable:$true] %s2227
          %2230 = dma.vmem_to_hbm [thread:$0]  %s2228, 128, %s2225, %s2213
        $region48: #{tpu_custom_call.1} parent=43 // pred_fallthru
          _
      $region44: #{tpu_custom_call.1} parent=5 // pred_fallthru
        _
      %p2231 = scmp.le.s32.totalorder 2, %s15
      // Predicated region
      $region49: #{tpu_custom_call.1} parent=5 // pred_check
        %p2232 = pneg %p2231
      $region50: #{tpu_custom_call.1} parent=5 // pred_check_branch
        %2234 = sbr.rel (%p2232) target = $region52
      $region51: #{tpu_custom_call.1} parent=5 // pred_region
        %s2235 = ssub.s32 %s15, 2
        // Predicated region
        $region53: #{tpu_custom_call.1} parent=51 // pred_check
          %p2236 = pneg %p175
        $region54: #{tpu_custom_call.1} parent=51 // pred_check_branch
          %2238 = sbr.rel (%p2236) target = $region56
        $region55: #{tpu_custom_call.1} parent=51 // pred_region
          %s2239 = sand.u32 %s160, 1
          %s2240 = scalar_lea.sflag [#allocation3], %s2239
          %s2241 = sand.u32 %s160, 1
          %s2242 = smul.addr %s2241, 8
          %s2243 = scalar_lea.vmem [#allocation2], %s2242
          %2244 = dma.done %s2240, 128
        $region56: #{tpu_custom_call.1} parent=51 // pred_fallthru
          _
      $region52: #{tpu_custom_call.1} parent=5 // pred_fallthru
        _
    $region6: #{tpu_custom_call.1} parent=1 // loop_footer
      %s19 = sadd.s32 1, %s15
    $region7: #{tpu_custom_call.1} parent=1 // loop_footer_branch
      %14 = sbr.rel target = $region3
    $region8: #{tpu_custom_call.1} parent=1 // loop_exit
      _
    %2245 = vsyncpa [#allocation3], 1
    %s2246 = scalar_lea.sflag [#allocation3], 1
    %2247 = vsyncpa %s2246, 1

</llo_original>
